<compile_context>
chip_gen: v7x
topology: tpu7x:2x2x1
jax: 0.10.0
libtpu: 0.0.40
codegen_flags: <defaults>
</compile_context>

<pallas_src>
import jax
import jax.numpy as jnp
from jax.experimental import pallas as pl
from jax.experimental.pallas import tpu as pltpu


# ----------------------------------------------------------------------------
# Pallas kernel
# ----------------------------------------------------------------------------
def sentence_rnn_kernel(
    x_ref,        # (T, Bblk, 2*Din)  f32   paired input: [x_t ; x_{T-1-t}]
    w_in_ref,     # (2*Din, 6H)       cdt   block input weight, cols [r_f,r_b,z_f,z_b,n_f,n_b]
    b_gi_ref,     # (1, 6H)           f32   bi+bh for r,z ; bi only for n
    w_hh_ref,     # (2H, 6H)          cdt   block-diagonal hidden weight
    b_hn_ref,     # (1, 2H)           f32   hidden-side n bias [fwd | bwd]
    wl_ref,       # (2H, 2H)          cdt   sentence_linear.weight^T
    bl_ref,       # (1, 2H)           f32
    ctx_ref,      # (1, 1, 2H)        f32   sentence context vector
    wfc_ref,      # (2H, C)           cdt   fc.weight^T
    bfc_ref,      # (1, C)            f32
    out_ref,      # (Bblk, C)         f32
    hs_ref,       # scratch VMEM (T*Bblk, 2H) f32 : time-aligned [h_fwd | h_bwd]
):
    T, bb, din2 = x_ref.shape
    HH = w_hh_ref.shape[0]          # 2H
    H = HH // 2
    cdt = w_in_ref.dtype            # MXU operand dtype (bf16 or f32)
    f32 = jnp.float32

    # ---- all input-side gate projections in a single batched matmul ----------
    x2 = x_ref[...].reshape(T * bb, din2).astype(cdt)
    gi_all = (
        jnp.dot(x2, w_in_ref[...], preferred_element_type=f32) + b_gi_ref[...]
    )                                                   # (T*bb, 6H)

    # hoist weight / bias loads out of the unrolled recurrence
    w_hh = w_hh_ref[...]
    b_hn = b_hn_ref[...]

    # ---- fused bidirectional GRU recurrence: one MXU push per step -----------
    h = jnp.zeros((bb, HH), f32)                        # [h_fwd | h_bwd]
    for t in range(T):                                  # static unroll (small T)
        gi = gi_all[t * bb:(t + 1) * bb, :]             # (bb, 6H)
        gh = jnp.dot(h.astype(cdt), w_hh, preferred_element_type=f32)  # (bb, 6H)

        rz = jax.nn.sigmoid(gi[:, : 2 * HH] + gh[:, : 2 * HH])  # [r_f,r_b,z_f,z_b]
        r = rz[:, :HH]
        z = rz[:, HH:]
        n = jnp.tanh(gi[:, 2 * HH:] + r * (gh[:, 2 * HH:] + b_hn))
        h = (1.0 - z) * n + z * h

        # forward hidden of step t belongs to time t; backward hidden to time T-1-t
        s = T - 1 - t
        hs_ref[t * bb:(t + 1) * bb, 0:H] = h[:, 0:H]
        hs_ref[s * bb:(s + 1) * bb, H:HH] = h[:, H:HH]

    # ---- attention over time, batched: one matmul + one tanh + one reduce ----
    hs = hs_ref[...]                                                  # (T*bb, 2H)
    u = jnp.tanh(
        jnp.dot(hs.astype(cdt), wl_ref[...], preferred_element_type=f32)
        + bl_ref[...]
    )
    u3 = u.reshape(T, bb, HH)
    scores = jnp.sum(u3 * ctx_ref[...], axis=-1, keepdims=True)       # (T, bb, 1)

    # softmax over the time axis (leading dim -> cheap slab max/sum)
    m = jnp.max(scores, axis=0, keepdims=True)
    e = jnp.exp(scores - m)
    alpha = e / jnp.sum(e, axis=0, keepdims=True)                     # (T, bb, 1)

    pooled = jnp.sum(hs.reshape(T, bb, HH) * alpha, axis=0)           # (bb, 2H)

    # final classifier (C is tiny -> one masked store per grid step; negligible)
    out_ref[...] = (
        jnp.dot(pooled.astype(cdt), wfc_ref[...], preferred_element_type=f32)
        + bfc_ref[...]
    )


# ----------------------------------------------------------------------------
# Wrapper
# ----------------------------------------------------------------------------
def sentence_rnn_forward(x, p, *, block_b=8):
    """x: (T, B, 2*word_hidden) f32, p: packed params from pack_params()."""
    T, B, Din = x.shape
    HH = p["wl"].shape[0]                 # 2 * sentence_hidden
    C = p["bfc"].shape[-1]
    bb = min(block_b, B)
    assert B % bb == 0, "batch must be divisible by the batch block"

    # pair each timestep with its mirror for the backward direction (plain JAX)
    x_pair = jnp.concatenate([x, x[::-1]], axis=-1)     # (T, B, 2*Din)

    weights = (p["w_in"], p["b_gi"], p["w_hh"], p["b_hn"],
               p["wl"], p["bl"], p["ctx"], p["wfc"], p["bfc"])

    def full_spec(a):
        nd = a.ndim
        return pl.BlockSpec(a.shape, lambda i, _nd=nd: (0,) * _nd)

    in_specs = [pl.BlockSpec((T, bb, 2 * Din), lambda i: (0, i, 0))]
    in_specs += [full_spec(w) for w in weights]

    return pl.pallas_call(
        sentence_rnn_kernel,
        out_shape=jax.ShapeDtypeStruct((B, C), jnp.float32),
        grid=(B // bb,),
        in_specs=in_specs,
        out_specs=pl.BlockSpec((bb, C), lambda i: (i, 0)),
        scratch_shapes=[pltpu.VMEM((T * bb, HH), jnp.float32)],
        compiler_params=pltpu.CompilerParams(
            dimension_semantics=("parallel",)),   # shards batch blocks over v7x's 2 TCs
    )(x_pair, *weights)


# ----------------------------------------------------------------------------
# Deterministic parameter init (PyTorch layout) + packing for the kernel
# ----------------------------------------------------------------------------
def init_raw_params(key, word_hidden, sent_hidden, n_classes):
    H = sent_hidden
    Din = 2 * word_hidden          # word_gru_output_size
    D2 = 2 * H                     # sentence_gru_output_size
    ks = jax.random.split(key, 13)
    uni = lambda k, shp, lim: jax.random.uniform(k, shp, jnp.float32, -lim, lim)
    s_gru = float(1.0 / (H ** 0.5))
    s_lin = float(1.0 / (D2 ** 0.5))
    return dict(
        w_ih_f=uni(ks[0], (3 * H, Din), s_gru), w_hh_f=uni(ks[1], (3 * H, H), s_gru),
        b_ih_f=uni(ks[2], (3 * H,), s_gru),     b_hh_f=uni(ks[3], (3 * H,), s_gru),
        w_ih_b=uni(ks[4], (3 * H, Din), s_gru), w_hh_b=uni(ks[5], (3 * H, H), s_gru),
        b_ih_b=uni(ks[6], (3 * H,), s_gru),     b_hh_b=uni(ks[7], (3 * H,), s_gru),
        w_lin=uni(ks[8], (D2, D2), s_lin),      b_lin=uni(ks[9], (D2,), s_lin),
        ctx=uni(ks[10], (D2, 1), 0.1),
        w_fc=uni(ks[11], (n_classes, D2), s_lin), b_fc=uni(ks[12], (n_classes,), s_lin),
    )


def pack_params(raw, compute_dtype=jnp.bfloat16):
    """Pack PyTorch-layout GRU/linear weights into the fused kernel layout.

    Matmul operands are cast to `compute_dtype` (bf16 for v6e/v7x MXU, f32 for
    a bit-accurate path).  Biases / context stay f32 (f32 elementwise math).
    """
    H = raw["w_hh_f"].shape[1]
    Din = raw["w_ih_f"].shape[1]
    D2 = 2 * H
    C = raw["w_fc"].shape[0]

    def gate(w, g):          # (3H, K) -> gate-g rows (H, K); PyTorch order (r, z, n)
        return w[g * H:(g + 1) * H, :]

    def bgate(b, g):
        return b[g * H:(g + 1) * H]

    def dir_cols(blocks_T, zero, fwd):
        # blocks_T = [r^T, z^T, n^T] each (K, H); column layout [r_f,r_b,z_f,z_b,n_f,n_b]
        rT, zT, nT = blocks_T
        if fwd:
            return jnp.concatenate([rT, zero, zT, zero, nT, zero], axis=1)
        return jnp.concatenate([zero, rT, zero, zT, zero, nT], axis=1)

    zD = jnp.zeros((Din, H), jnp.float32)
    zH = jnp.zeros((H, H), jnp.float32)

    w_in_pair = jnp.concatenate([
        dir_cols([gate(raw["w_ih_f"], g).T for g in range(3)], zD, True),
        dir_cols([gate(raw["w_ih_b"], g).T for g in range(3)], zD, False),
    ], axis=0)                                            # (2*Din, 6H)

    w_hh_cat = jnp.concatenate([
        dir_cols([gate(raw["w_hh_f"], g).T for g in range(3)], zH, True),
        dir_cols([gate(raw["w_hh_b"], g).T for g in range(3)], zH, False),
    ], axis=0)                                            # (2H, 6H)

    b_gi = jnp.concatenate([
        bgate(raw["b_ih_f"], 0) + bgate(raw["b_hh_f"], 0),   # r_f
        bgate(raw["b_ih_b"], 0) + bgate(raw["b_hh_b"], 0),   # r_b
        bgate(raw["b_ih_f"], 1) + bgate(raw["b_hh_f"], 1),   # z_f
        bgate(raw["b_ih_b"], 1) + bgate(raw["b_hh_b"], 1),   # z_b
        bgate(raw["b_ih_f"], 2),                             # n_f (input side only)
        bgate(raw["b_ih_b"], 2),                             # n_b
    ]).reshape(1, 6 * H)

    b_hn = jnp.concatenate([bgate(raw["b_hh_f"], 2),
                            bgate(raw["b_hh_b"], 2)]).reshape(1, D2)

    cd = compute_dtype
    return dict(
        w_in=w_in_pair.astype(cd),
        b_gi=b_gi,
        w_hh=w_hh_cat.astype(cd),
        b_hn=b_hn,
        wl=raw["w_lin"].T.astype(cd),
        bl=raw["b_lin"].reshape(1, D2),
        ctx=raw["ctx"].reshape(1, 1, D2),
        wfc=raw["w_fc"].T.astype(cd),
        bfc=raw["b_fc"].reshape(1, C),
    )


# ----------------------------------------------------------------------------
# Pure-JAX reference (mirrors the PyTorch forward exactly), for validation
# ----------------------------------------------------------------------------
def reference_forward(x, raw):
    T, B, _ = x.shape
    H = raw["w_hh_f"].shape[1]

    def gru_dir(w_ih, w_hh, b_ih, b_hh, xs, reverse):
        def step(h, xt):
            gi = xt @ w_ih.T + b_ih
            gh = h @ w_hh.T + b_hh
            i_r, i_z, i_n = jnp.split(gi, 3, axis=1)
            h_r, h_z, h_n = jnp.split(gh, 3, axis=1)
            r = jax.nn.sigmoid(i_r + h_r)
            z = jax.nn.sigmoid(i_z + h_z)
            n = jnp.tanh(i_n + r * h_n)
            h_new = (1.0 - z) * n + z * h
            return h_new, h_new

        h0 = jnp.zeros((B, H), jnp.float32)
        xs_ = xs[::-1] if reverse else xs
        _, hs = jax.lax.scan(step, h0, xs_)
        return hs[::-1] if reverse else hs

    hf = gru_dir(raw["w_ih_f"], raw["w_hh_f"], raw["b_ih_f"], raw["b_hh_f"], x, False)
    hb = gru_dir(raw["w_ih_b"], raw["w_hh_b"], raw["b_ih_b"], raw["b_hh_b"], x, True)
    h = jnp.concatenate([hf, hb], axis=-1)                 # (T, B, 2H)
    u = jnp.tanh(h @ raw["w_lin"].T + raw["b_lin"])        # (T, B, 2H)
    scores = (u @ raw["ctx"])[..., 0]                      # (T, B)
    alpha = jax.nn.softmax(scores.T, axis=1)               # (B, T)
    s = jnp.sum(h * alpha.T[:, :, None], axis=0)           # (B, 2H)
    return s @ raw["w_fc"].T + raw["b_fc"]                 # (B, C)


# ----------------------------------------------------------------------------
if __name__ == "__main__":
    T, B = 8, 16
    word_hidden, sent_hidden, n_classes = 16, 16, 5

    key = jax.random.PRNGKey(0)
    kx, kp = jax.random.split(key)
    x = jax.random.normal(kx, (T, B, 2 * word_hidden), jnp.float32)
    raw = init_raw_params(kp, word_hidden, sent_hidden, n_classes)

    # high-precision reference
    with jax.default_matmul_precision("highest"):
        ref = jax.block_until_ready(reference_forward(x, raw))

    # f32 MXU operands: tight algorithmic check (observed error ~1e-6)
    out_f32 = jax.block_until_ready(
        sentence_rnn_forward(x, pack_params(raw, jnp.float32), block_b=8))
    err_f32 = float(jnp.max(jnp.abs(out_f32 - ref)))

    # bf16 MXU operands / f32 accumulate+elementwise: looser, bf16-appropriate check
    out_bf16 = jax.block_until_ready(
        sentence_rnn_forward(x, pack_params(raw, jnp.bfloat16), block_b=8))
    err_bf16 = float(jnp.max(jnp.abs(out_bf16 - ref)))

    ok = (out_f32.shape == (B, n_classes)
          and err_f32 < 1e-3       # f32 path must be essentially exact
          and err_bf16 < 5e-2)     # bf16 operand quantization through the recurrence
    if ok:
        print("KERNEL_OK")
    else:
        print(f"MISMATCH err_f32={err_f32:.3e} err_bf16={err_bf16:.3e}")
</pallas_src>

<mosaic_0001>
module attributes {stable_mosaic.version = 11 : i64} {
  func.func @sentence_rnn_kernel(%arg0: i32, %arg1: memref<8x8x64xf32, #tpu.memory_space<vmem>>, %arg2: memref<64x96xf32, #tpu.memory_space<vmem>>, %arg3: memref<1x96xf32, #tpu.memory_space<vmem>>, %arg4: memref<32x96xf32, #tpu.memory_space<vmem>>, %arg5: memref<1x32xf32, #tpu.memory_space<vmem>>, %arg6: memref<32x32xf32, #tpu.memory_space<vmem>>, %arg7: memref<1x32xf32, #tpu.memory_space<vmem>>, %arg8: memref<1x1x32xf32, #tpu.memory_space<vmem>>, %arg9: memref<32x5xf32, #tpu.memory_space<vmem>>, %arg10: memref<1x5xf32, #tpu.memory_space<vmem>>, %arg11: memref<8x5xf32, #tpu.memory_space<vmem>>, %arg12: memref<64x32xf32, #tpu.memory_space<vmem>>) attributes {dimension_semantics = [#tpu.dimension_semantics<parallel>], iteration_bounds = array<i64: 2>, scalar_prefetch = 0 : i64, scratch_operands = 1 : i64, tpu.core_type = #tpu.core_type<tc>, window_params = [{transform_indices = @transform_0, window_bounds = array<i64: 8, 8, 64>}, {pipeline_mode = #tpu.pipeline_mode<synchronous>, transform_indices = @transform_1, window_bounds = array<i64: 64, 96>}, {pipeline_mode = #tpu.pipeline_mode<synchronous>, transform_indices = @transform_2, window_bounds = array<i64: 1, 96>}, {pipeline_mode = #tpu.pipeline_mode<synchronous>, transform_indices = @transform_3, window_bounds = array<i64: 32, 96>}, {pipeline_mode = #tpu.pipeline_mode<synchronous>, transform_indices = @transform_4, window_bounds = array<i64: 1, 32>}, {pipeline_mode = #tpu.pipeline_mode<synchronous>, transform_indices = @transform_5, window_bounds = array<i64: 32, 32>}, {pipeline_mode = #tpu.pipeline_mode<synchronous>, transform_indices = @transform_6, window_bounds = array<i64: 1, 32>}, {pipeline_mode = #tpu.pipeline_mode<synchronous>, transform_indices = @transform_7, window_bounds = array<i64: 1, 1, 32>}, {pipeline_mode = #tpu.pipeline_mode<synchronous>, transform_indices = @transform_8, window_bounds = array<i64: 32, 5>}, {pipeline_mode = #tpu.pipeline_mode<synchronous>, transform_indices = @transform_9, window_bounds = array<i64: 1, 5>}, {transform_indices = @transform_10, window_bounds = array<i64: 8, 5>}]} {
    %c0 = arith.constant 0 : index
    %c0_0 = arith.constant 0 : index
    %c0_1 = arith.constant 0 : index
    %0 = vector.load %arg1[%c0, %c0_0, %c0_1] : memref<8x8x64xf32, #tpu.memory_space<vmem>>, vector<8x8x64xf32>
    %1 = vector.shape_cast %0 : vector<8x8x64xf32> to vector<64x64xf32>
    %c0_2 = arith.constant 0 : index
    %c0_3 = arith.constant 0 : index
    %2 = vector.load %arg2[%c0_2, %c0_3] : memref<64x96xf32, #tpu.memory_space<vmem>>, vector<64x96xf32>
    %cst = arith.constant dense<0.000000e+00> : vector<64x96xf32>
    %3 = tpu.matmul %1, %2, %cst {dimension_numbers = #tpu.dot_dimension_numbers<[1], [0], [0], [1], [0, 0, 1, 1], [], []>} : vector<64x64xf32>, vector<64x96xf32>, vector<64x96xf32> -> vector<64x96xf32>
    %c0_4 = arith.constant 0 : index
    %c0_5 = arith.constant 0 : index
    %4 = vector.load %arg3[%c0_4, %c0_5] : memref<1x96xf32, #tpu.memory_space<vmem>>, vector<1x96xf32>
    %5 = vector.broadcast %4 : vector<1x96xf32> to vector<64x96xf32>
    %6 = arith.addf %3, %5 : vector<64x96xf32>
    %c0_6 = arith.constant 0 : index
    %c0_7 = arith.constant 0 : index
    %7 = vector.load %arg4[%c0_6, %c0_7] : memref<32x96xf32, #tpu.memory_space<vmem>>, vector<32x96xf32>
    %c0_8 = arith.constant 0 : index
    %c0_9 = arith.constant 0 : index
    %8 = vector.load %arg5[%c0_8, %c0_9] : memref<1x32xf32, #tpu.memory_space<vmem>>, vector<1x32xf32>
    %cst_10 = arith.constant 0.000000e+00 : f32
    %9 = vector.broadcast %cst_10 : f32 to vector<8x32xf32>
    %10 = vector.extract_strided_slice %6 {offsets = [0, 0], sizes = [8, 96], strides = [1, 1]} : vector<64x96xf32> to vector<8x96xf32>
    %cst_11 = arith.constant dense<0.000000e+00> : vector<8x96xf32>
    %11 = tpu.matmul %9, %7, %cst_11 {dimension_numbers = #tpu.dot_dimension_numbers<[1], [0], [0], [1], [0, 0, 1, 1], [], []>} : vector<8x32xf32>, vector<32x96xf32>, vector<8x96xf32> -> vector<8x96xf32>
    %12 = vector.extract_strided_slice %10 {offsets = [0, 0], sizes = [8, 64], strides = [1, 1]} : vector<8x96xf32> to vector<8x64xf32>
    %13 = vector.extract_strided_slice %11 {offsets = [0, 0], sizes = [8, 64], strides = [1, 1]} : vector<8x96xf32> to vector<8x64xf32>
    %14 = arith.addf %12, %13 : vector<8x64xf32>
    %15 = arith.negf %14 : vector<8x64xf32>
    %16 = math.exp %15 : vector<8x64xf32>
    %cst_12 = arith.constant 1.000000e+00 : f32
    %17 = vector.broadcast %cst_12 : f32 to vector<8x64xf32>
    %18 = arith.addf %17, %16 : vector<8x64xf32>
    %19 = arith.divf %17, %18 : vector<8x64xf32>
    %20 = vector.extract_strided_slice %19 {offsets = [0, 0], sizes = [8, 32], strides = [1, 1]} : vector<8x64xf32> to vector<8x32xf32>
    %21 = vector.extract_strided_slice %19 {offsets = [0, 32], sizes = [8, 32], strides = [1, 1]} : vector<8x64xf32> to vector<8x32xf32>
    %22 = vector.extract_strided_slice %10 {offsets = [0, 64], sizes = [8, 32], strides = [1, 1]} : vector<8x96xf32> to vector<8x32xf32>
    %23 = vector.extract_strided_slice %11 {offsets = [0, 64], sizes = [8, 32], strides = [1, 1]} : vector<8x96xf32> to vector<8x32xf32>
    %24 = vector.broadcast %8 : vector<1x32xf32> to vector<8x32xf32>
    %25 = arith.addf %23, %24 : vector<8x32xf32>
    %26 = arith.mulf %20, %25 : vector<8x32xf32>
    %27 = arith.addf %22, %26 : vector<8x32xf32>
    %28 = math.tanh %27 : vector<8x32xf32>
    %cst_13 = arith.constant 1.000000e+00 : f32
    %29 = vector.broadcast %cst_13 : f32 to vector<8x32xf32>
    %30 = arith.subf %29, %21 : vector<8x32xf32>
    %31 = arith.mulf %30, %28 : vector<8x32xf32>
    %32 = arith.mulf %21, %9 : vector<8x32xf32>
    %33 = arith.addf %31, %32 : vector<8x32xf32>
    %34 = vector.extract_strided_slice %33 {offsets = [0, 0], sizes = [8, 16], strides = [1, 1]} : vector<8x32xf32> to vector<8x16xf32>
    %c0_14 = arith.constant 0 : index
    %c0_15 = arith.constant 0 : index
    %35 = vector.load %arg12[%c0_14, %c0_15] : memref<64x32xf32, #tpu.memory_space<vmem>>, vector<8x16xf32>
    tpu.vector_store %arg12[%c0_14, %c0_15], %34 {strides = array<i32>} : memref<64x32xf32, #tpu.memory_space<vmem>>, vector<8x16xf32>,
    %36 = vector.extract_strided_slice %33 {offsets = [0, 16], sizes = [8, 16], strides = [1, 1]} : vector<8x32xf32> to vector<8x16xf32>
    %c56 = arith.constant 56 : index
    %c16 = arith.constant 16 : index
    %37 = vector.load %arg12[%c56, %c16] : memref<64x32xf32, #tpu.memory_space<vmem>>, vector<8x16xf32>
    tpu.vector_store %arg12[%c56, %c16], %36 {strides = array<i32>} : memref<64x32xf32, #tpu.memory_space<vmem>>, vector<8x16xf32>,
    %38 = vector.extract_strided_slice %6 {offsets = [8, 0], sizes = [8, 96], strides = [1, 1]} : vector<64x96xf32> to vector<8x96xf32>
    %cst_16 = arith.constant dense<0.000000e+00> : vector<8x96xf32>
    %39 = tpu.matmul %33, %7, %cst_16 {dimension_numbers = #tpu.dot_dimension_numbers<[1], [0], [0], [1], [0, 0, 1, 1], [], []>} : vector<8x32xf32>, vector<32x96xf32>, vector<8x96xf32> -> vector<8x96xf32>
    %40 = vector.extract_strided_slice %38 {offsets = [0, 0], sizes = [8, 64], strides = [1, 1]} : vector<8x96xf32> to vector<8x64xf32>
    %41 = vector.extract_strided_slice %39 {offsets = [0, 0], sizes = [8, 64], strides = [1, 1]} : vector<8x96xf32> to vector<8x64xf32>
    %42 = arith.addf %40, %41 : vector<8x64xf32>
    %43 = arith.negf %42 : vector<8x64xf32>
    %44 = math.exp %43 : vector<8x64xf32>
    %cst_17 = arith.constant 1.000000e+00 : f32
    %45 = vector.broadcast %cst_17 : f32 to vector<8x64xf32>
    %46 = arith.addf %45, %44 : vector<8x64xf32>
    %47 = arith.divf %45, %46 : vector<8x64xf32>
    %48 = vector.extract_strided_slice %47 {offsets = [0, 0], sizes = [8, 32], strides = [1, 1]} : vector<8x64xf32> to vector<8x32xf32>
    %49 = vector.extract_strided_slice %47 {offsets = [0, 32], sizes = [8, 32], strides = [1, 1]} : vector<8x64xf32> to vector<8x32xf32>
    %50 = vector.extract_strided_slice %38 {offsets = [0, 64], sizes = [8, 32], strides = [1, 1]} : vector<8x96xf32> to vector<8x32xf32>
    %51 = vector.extract_strided_slice %39 {offsets = [0, 64], sizes = [8, 32], strides = [1, 1]} : vector<8x96xf32> to vector<8x32xf32>
    %52 = vector.broadcast %8 : vector<1x32xf32> to vector<8x32xf32>
    %53 = arith.addf %51, %52 : vector<8x32xf32>
    %54 = arith.mulf %48, %53 : vector<8x32xf32>
    %55 = arith.addf %50, %54 : vector<8x32xf32>
    %56 = math.tanh %55 : vector<8x32xf32>
    %cst_18 = arith.constant 1.000000e+00 : f32
    %57 = vector.broadcast %cst_18 : f32 to vector<8x32xf32>
    %58 = arith.subf %57, %49 : vector<8x32xf32>
    %59 = arith.mulf %58, %56 : vector<8x32xf32>
    %60 = arith.mulf %49, %33 : vector<8x32xf32>
    %61 = arith.addf %59, %60 : vector<8x32xf32>
    %62 = vector.extract_strided_slice %61 {offsets = [0, 0], sizes = [8, 16], strides = [1, 1]} : vector<8x32xf32> to vector<8x16xf32>
    %c8 = arith.constant 8 : index
    %c0_19 = arith.constant 0 : index
    %63 = vector.load %arg12[%c8, %c0_19] : memref<64x32xf32, #tpu.memory_space<vmem>>, vector<8x16xf32>
    tpu.vector_store %arg12[%c8, %c0_19], %62 {strides = array<i32>} : memref<64x32xf32, #tpu.memory_space<vmem>>, vector<8x16xf32>,
    %64 = vector.extract_strided_slice %61 {offsets = [0, 16], sizes = [8, 16], strides = [1, 1]} : vector<8x32xf32> to vector<8x16xf32>
    %c48 = arith.constant 48 : index
    %c16_20 = arith.constant 16 : index
    %65 = vector.load %arg12[%c48, %c16_20] : memref<64x32xf32, #tpu.memory_space<vmem>>, vector<8x16xf32>
    tpu.vector_store %arg12[%c48, %c16_20], %64 {strides = array<i32>} : memref<64x32xf32, #tpu.memory_space<vmem>>, vector<8x16xf32>,
    %66 = vector.extract_strided_slice %6 {offsets = [16, 0], sizes = [8, 96], strides = [1, 1]} : vector<64x96xf32> to vector<8x96xf32>
    %cst_21 = arith.constant dense<0.000000e+00> : vector<8x96xf32>
    %67 = tpu.matmul %61, %7, %cst_21 {dimension_numbers = #tpu.dot_dimension_numbers<[1], [0], [0], [1], [0, 0, 1, 1], [], []>} : vector<8x32xf32>, vector<32x96xf32>, vector<8x96xf32> -> vector<8x96xf32>
    %68 = vector.extract_strided_slice %66 {offsets = [0, 0], sizes = [8, 64], strides = [1, 1]} : vector<8x96xf32> to vector<8x64xf32>
    %69 = vector.extract_strided_slice %67 {offsets = [0, 0], sizes = [8, 64], strides = [1, 1]} : vector<8x96xf32> to vector<8x64xf32>
    %70 = arith.addf %68, %69 : vector<8x64xf32>
    %71 = arith.negf %70 : vector<8x64xf32>
    %72 = math.exp %71 : vector<8x64xf32>
    %cst_22 = arith.constant 1.000000e+00 : f32
    %73 = vector.broadcast %cst_22 : f32 to vector<8x64xf32>
    %74 = arith.addf %73, %72 : vector<8x64xf32>
    %75 = arith.divf %73, %74 : vector<8x64xf32>
    %76 = vector.extract_strided_slice %75 {offsets = [0, 0], sizes = [8, 32], strides = [1, 1]} : vector<8x64xf32> to vector<8x32xf32>
    %77 = vector.extract_strided_slice %75 {offsets = [0, 32], sizes = [8, 32], strides = [1, 1]} : vector<8x64xf32> to vector<8x32xf32>
    %78 = vector.extract_strided_slice %66 {offsets = [0, 64], sizes = [8, 32], strides = [1, 1]} : vector<8x96xf32> to vector<8x32xf32>
    %79 = vector.extract_strided_slice %67 {offsets = [0, 64], sizes = [8, 32], strides = [1, 1]} : vector<8x96xf32> to vector<8x32xf32>
    %80 = vector.broadcast %8 : vector<1x32xf32> to vector<8x32xf32>
    %81 = arith.addf %79, %80 : vector<8x32xf32>
    %82 = arith.mulf %76, %81 : vector<8x32xf32>
    %83 = arith.addf %78, %82 : vector<8x32xf32>
    %84 = math.tanh %83 : vector<8x32xf32>
    %cst_23 = arith.constant 1.000000e+00 : f32
    %85 = vector.broadcast %cst_23 : f32 to vector<8x32xf32>
    %86 = arith.subf %85, %77 : vector<8x32xf32>
    %87 = arith.mulf %86, %84 : vector<8x32xf32>
    %88 = arith.mulf %77, %61 : vector<8x32xf32>
    %89 = arith.addf %87, %88 : vector<8x32xf32>
    %90 = vector.extract_strided_slice %89 {offsets = [0, 0], sizes = [8, 16], strides = [1, 1]} : vector<8x32xf32> to vector<8x16xf32>
    %c16_24 = arith.constant 16 : index
    %c0_25 = arith.constant 0 : index
    %91 = vector.load %arg12[%c16_24, %c0_25] : memref<64x32xf32, #tpu.memory_space<vmem>>, vector<8x16xf32>
    tpu.vector_store %arg12[%c16_24, %c0_25], %90 {strides = array<i32>} : memref<64x32xf32, #tpu.memory_space<vmem>>, vector<8x16xf32>,
    %92 = vector.extract_strided_slice %89 {offsets = [0, 16], sizes = [8, 16], strides = [1, 1]} : vector<8x32xf32> to vector<8x16xf32>
    %c40 = arith.constant 40 : index
    %c16_26 = arith.constant 16 : index
    %93 = vector.load %arg12[%c40, %c16_26] : memref<64x32xf32, #tpu.memory_space<vmem>>, vector<8x16xf32>
    tpu.vector_store %arg12[%c40, %c16_26], %92 {strides = array<i32>} : memref<64x32xf32, #tpu.memory_space<vmem>>, vector<8x16xf32>,
    %94 = vector.extract_strided_slice %6 {offsets = [24, 0], sizes = [8, 96], strides = [1, 1]} : vector<64x96xf32> to vector<8x96xf32>
    %cst_27 = arith.constant dense<0.000000e+00> : vector<8x96xf32>
    %95 = tpu.matmul %89, %7, %cst_27 {dimension_numbers = #tpu.dot_dimension_numbers<[1], [0], [0], [1], [0, 0, 1, 1], [], []>} : vector<8x32xf32>, vector<32x96xf32>, vector<8x96xf32> -> vector<8x96xf32>
    %96 = vector.extract_strided_slice %94 {offsets = [0, 0], sizes = [8, 64], strides = [1, 1]} : vector<8x96xf32> to vector<8x64xf32>
    %97 = vector.extract_strided_slice %95 {offsets = [0, 0], sizes = [8, 64], strides = [1, 1]} : vector<8x96xf32> to vector<8x64xf32>
    %98 = arith.addf %96, %97 : vector<8x64xf32>
    %99 = arith.negf %98 : vector<8x64xf32>
    %100 = math.exp %99 : vector<8x64xf32>
    %cst_28 = arith.constant 1.000000e+00 : f32
    %101 = vector.broadcast %cst_28 : f32 to vector<8x64xf32>
    %102 = arith.addf %101, %100 : vector<8x64xf32>
    %103 = arith.divf %101, %102 : vector<8x64xf32>
    %104 = vector.extract_strided_slice %103 {offsets = [0, 0], sizes = [8, 32], strides = [1, 1]} : vector<8x64xf32> to vector<8x32xf32>
    %105 = vector.extract_strided_slice %103 {offsets = [0, 32], sizes = [8, 32], strides = [1, 1]} : vector<8x64xf32> to vector<8x32xf32>
    %106 = vector.extract_strided_slice %94 {offsets = [0, 64], sizes = [8, 32], strides = [1, 1]} : vector<8x96xf32> to vector<8x32xf32>
    %107 = vector.extract_strided_slice %95 {offsets = [0, 64], sizes = [8, 32], strides = [1, 1]} : vector<8x96xf32> to vector<8x32xf32>
    %108 = vector.broadcast %8 : vector<1x32xf32> to vector<8x32xf32>
    %109 = arith.addf %107, %108 : vector<8x32xf32>
    %110 = arith.mulf %104, %109 : vector<8x32xf32>
    %111 = arith.addf %106, %110 : vector<8x32xf32>
    %112 = math.tanh %111 : vector<8x32xf32>
    %cst_29 = arith.constant 1.000000e+00 : f32
    %113 = vector.broadcast %cst_29 : f32 to vector<8x32xf32>
    %114 = arith.subf %113, %105 : vector<8x32xf32>
    %115 = arith.mulf %114, %112 : vector<8x32xf32>
    %116 = arith.mulf %105, %89 : vector<8x32xf32>
    %117 = arith.addf %115, %116 : vector<8x32xf32>
    %118 = vector.extract_strided_slice %117 {offsets = [0, 0], sizes = [8, 16], strides = [1, 1]} : vector<8x32xf32> to vector<8x16xf32>
    %c24 = arith.constant 24 : index
    %c0_30 = arith.constant 0 : index
    %119 = vector.load %arg12[%c24, %c0_30] : memref<64x32xf32, #tpu.memory_space<vmem>>, vector<8x16xf32>
    tpu.vector_store %arg12[%c24, %c0_30], %118 {strides = array<i32>} : memref<64x32xf32, #tpu.memory_space<vmem>>, vector<8x16xf32>,
    %120 = vector.extract_strided_slice %117 {offsets = [0, 16], sizes = [8, 16], strides = [1, 1]} : vector<8x32xf32> to vector<8x16xf32>
    %c32 = arith.constant 32 : index
    %c16_31 = arith.constant 16 : index
    %121 = vector.load %arg12[%c32, %c16_31] : memref<64x32xf32, #tpu.memory_space<vmem>>, vector<8x16xf32>
    tpu.vector_store %arg12[%c32, %c16_31], %120 {strides = array<i32>} : memref<64x32xf32, #tpu.memory_space<vmem>>, vector<8x16xf32>,
    %122 = vector.extract_strided_slice %6 {offsets = [32, 0], sizes = [8, 96], strides = [1, 1]} : vector<64x96xf32> to vector<8x96xf32>
    %cst_32 = arith.constant dense<0.000000e+00> : vector<8x96xf32>
    %123 = tpu.matmul %117, %7, %cst_32 {dimension_numbers = #tpu.dot_dimension_numbers<[1], [0], [0], [1], [0, 0, 1, 1], [], []>} : vector<8x32xf32>, vector<32x96xf32>, vector<8x96xf32> -> vector<8x96xf32>
    %124 = vector.extract_strided_slice %122 {offsets = [0, 0], sizes = [8, 64], strides = [1, 1]} : vector<8x96xf32> to vector<8x64xf32>
    %125 = vector.extract_strided_slice %123 {offsets = [0, 0], sizes = [8, 64], strides = [1, 1]} : vector<8x96xf32> to vector<8x64xf32>
    %126 = arith.addf %124, %125 : vector<8x64xf32>
    %127 = arith.negf %126 : vector<8x64xf32>
    %128 = math.exp %127 : vector<8x64xf32>
    %cst_33 = arith.constant 1.000000e+00 : f32
    %129 = vector.broadcast %cst_33 : f32 to vector<8x64xf32>
    %130 = arith.addf %129, %128 : vector<8x64xf32>
    %131 = arith.divf %129, %130 : vector<8x64xf32>
    %132 = vector.extract_strided_slice %131 {offsets = [0, 0], sizes = [8, 32], strides = [1, 1]} : vector<8x64xf32> to vector<8x32xf32>
    %133 = vector.extract_strided_slice %131 {offsets = [0, 32], sizes = [8, 32], strides = [1, 1]} : vector<8x64xf32> to vector<8x32xf32>
    %134 = vector.extract_strided_slice %122 {offsets = [0, 64], sizes = [8, 32], strides = [1, 1]} : vector<8x96xf32> to vector<8x32xf32>
    %135 = vector.extract_strided_slice %123 {offsets = [0, 64], sizes = [8, 32], strides = [1, 1]} : vector<8x96xf32> to vector<8x32xf32>
    %136 = vector.broadcast %8 : vector<1x32xf32> to vector<8x32xf32>
    %137 = arith.addf %135, %136 : vector<8x32xf32>
    %138 = arith.mulf %132, %137 : vector<8x32xf32>
    %139 = arith.addf %134, %138 : vector<8x32xf32>
    %140 = math.tanh %139 : vector<8x32xf32>
    %cst_34 = arith.constant 1.000000e+00 : f32
    %141 = vector.broadcast %cst_34 : f32 to vector<8x32xf32>
    %142 = arith.subf %141, %133 : vector<8x32xf32>
    %143 = arith.mulf %142, %140 : vector<8x32xf32>
    %144 = arith.mulf %133, %117 : vector<8x32xf32>
    %145 = arith.addf %143, %144 : vector<8x32xf32>
    %146 = vector.extract_strided_slice %145 {offsets = [0, 0], sizes = [8, 16], strides = [1, 1]} : vector<8x32xf32> to vector<8x16xf32>
    %c32_35 = arith.constant 32 : index
    %c0_36 = arith.constant 0 : index
    %147 = vector.load %arg12[%c32_35, %c0_36] : memref<64x32xf32, #tpu.memory_space<vmem>>, vector<8x16xf32>
    tpu.vector_store %arg12[%c32_35, %c0_36], %146 {strides = array<i32>} : memref<64x32xf32, #tpu.memory_space<vmem>>, vector<8x16xf32>,
    %148 = vector.extract_strided_slice %145 {offsets = [0, 16], sizes = [8, 16], strides = [1, 1]} : vector<8x32xf32> to vector<8x16xf32>
    %c24_37 = arith.constant 24 : index
    %c16_38 = arith.constant 16 : index
    %149 = vector.load %arg12[%c24_37, %c16_38] : memref<64x32xf32, #tpu.memory_space<vmem>>, vector<8x16xf32>
    tpu.vector_store %arg12[%c24_37, %c16_38], %148 {strides = array<i32>} : memref<64x32xf32, #tpu.memory_space<vmem>>, vector<8x16xf32>,
    %150 = vector.extract_strided_slice %6 {offsets = [40, 0], sizes = [8, 96], strides = [1, 1]} : vector<64x96xf32> to vector<8x96xf32>
    %cst_39 = arith.constant dense<0.000000e+00> : vector<8x96xf32>
    %151 = tpu.matmul %145, %7, %cst_39 {dimension_numbers = #tpu.dot_dimension_numbers<[1], [0], [0], [1], [0, 0, 1, 1], [], []>} : vector<8x32xf32>, vector<32x96xf32>, vector<8x96xf32> -> vector<8x96xf32>
    %152 = vector.extract_strided_slice %150 {offsets = [0, 0], sizes = [8, 64], strides = [1, 1]} : vector<8x96xf32> to vector<8x64xf32>
    %153 = vector.extract_strided_slice %151 {offsets = [0, 0], sizes = [8, 64], strides = [1, 1]} : vector<8x96xf32> to vector<8x64xf32>
    %154 = arith.addf %152, %153 : vector<8x64xf32>
    %155 = arith.negf %154 : vector<8x64xf32>
    %156 = math.exp %155 : vector<8x64xf32>
    %cst_40 = arith.constant 1.000000e+00 : f32
    %157 = vector.broadcast %cst_40 : f32 to vector<8x64xf32>
    %158 = arith.addf %157, %156 : vector<8x64xf32>
    %159 = arith.divf %157, %158 : vector<8x64xf32>
    %160 = vector.extract_strided_slice %159 {offsets = [0, 0], sizes = [8, 32], strides = [1, 1]} : vector<8x64xf32> to vector<8x32xf32>
    %161 = vector.extract_strided_slice %159 {offsets = [0, 32], sizes = [8, 32], strides = [1, 1]} : vector<8x64xf32> to vector<8x32xf32>
    %162 = vector.extract_strided_slice %150 {offsets = [0, 64], sizes = [8, 32], strides = [1, 1]} : vector<8x96xf32> to vector<8x32xf32>
    %163 = vector.extract_strided_slice %151 {offsets = [0, 64], sizes = [8, 32], strides = [1, 1]} : vector<8x96xf32> to vector<8x32xf32>
    %164 = vector.broadcast %8 : vector<1x32xf32> to vector<8x32xf32>
    %165 = arith.addf %163, %164 : vector<8x32xf32>
    %166 = arith.mulf %160, %165 : vector<8x32xf32>
    %167 = arith.addf %162, %166 : vector<8x32xf32>
    %168 = math.tanh %167 : vector<8x32xf32>
    %cst_41 = arith.constant 1.000000e+00 : f32
    %169 = vector.broadcast %cst_41 : f32 to vector<8x32xf32>
    %170 = arith.subf %169, %161 : vector<8x32xf32>
    %171 = arith.mulf %170, %168 : vector<8x32xf32>
    %172 = arith.mulf %161, %145 : vector<8x32xf32>
    %173 = arith.addf %171, %172 : vector<8x32xf32>
    %174 = vector.extract_strided_slice %173 {offsets = [0, 0], sizes = [8, 16], strides = [1, 1]} : vector<8x32xf32> to vector<8x16xf32>
    %c40_42 = arith.constant 40 : index
    %c0_43 = arith.constant 0 : index
    %175 = vector.load %arg12[%c40_42, %c0_43] : memref<64x32xf32, #tpu.memory_space<vmem>>, vector<8x16xf32>
    tpu.vector_store %arg12[%c40_42, %c0_43], %174 {strides = array<i32>} : memref<64x32xf32, #tpu.memory_space<vmem>>, vector<8x16xf32>,
    %176 = vector.extract_strided_slice %173 {offsets = [0, 16], sizes = [8, 16], strides = [1, 1]} : vector<8x32xf32> to vector<8x16xf32>
    %c16_44 = arith.constant 16 : index
    %c16_45 = arith.constant 16 : index
    %177 = vector.load %arg12[%c16_44, %c16_45] : memref<64x32xf32, #tpu.memory_space<vmem>>, vector<8x16xf32>
    tpu.vector_store %arg12[%c16_44, %c16_45], %176 {strides = array<i32>} : memref<64x32xf32, #tpu.memory_space<vmem>>, vector<8x16xf32>,
    %178 = vector.extract_strided_slice %6 {offsets = [48, 0], sizes = [8, 96], strides = [1, 1]} : vector<64x96xf32> to vector<8x96xf32>
    %cst_46 = arith.constant dense<0.000000e+00> : vector<8x96xf32>
    %179 = tpu.matmul %173, %7, %cst_46 {dimension_numbers = #tpu.dot_dimension_numbers<[1], [0], [0], [1], [0, 0, 1, 1], [], []>} : vector<8x32xf32>, vector<32x96xf32>, vector<8x96xf32> -> vector<8x96xf32>
    %180 = vector.extract_strided_slice %178 {offsets = [0, 0], sizes = [8, 64], strides = [1, 1]} : vector<8x96xf32> to vector<8x64xf32>
    %181 = vector.extract_strided_slice %179 {offsets = [0, 0], sizes = [8, 64], strides = [1, 1]} : vector<8x96xf32> to vector<8x64xf32>
    %182 = arith.addf %180, %181 : vector<8x64xf32>
    %183 = arith.negf %182 : vector<8x64xf32>
    %184 = math.exp %183 : vector<8x64xf32>
    %cst_47 = arith.constant 1.000000e+00 : f32
    %185 = vector.broadcast %cst_47 : f32 to vector<8x64xf32>
    %186 = arith.addf %185, %184 : vector<8x64xf32>
    %187 = arith.divf %185, %186 : vector<8x64xf32>
    %188 = vector.extract_strided_slice %187 {offsets = [0, 0], sizes = [8, 32], strides = [1, 1]} : vector<8x64xf32> to vector<8x32xf32>
    %189 = vector.extract_strided_slice %187 {offsets = [0, 32], sizes = [8, 32], strides = [1, 1]} : vector<8x64xf32> to vector<8x32xf32>
    %190 = vector.extract_strided_slice %178 {offsets = [0, 64], sizes = [8, 32], strides = [1, 1]} : vector<8x96xf32> to vector<8x32xf32>
    %191 = vector.extract_strided_slice %179 {offsets = [0, 64], sizes = [8, 32], strides = [1, 1]} : vector<8x96xf32> to vector<8x32xf32>
    %192 = vector.broadcast %8 : vector<1x32xf32> to vector<8x32xf32>
    %193 = arith.addf %191, %192 : vector<8x32xf32>
    %194 = arith.mulf %188, %193 : vector<8x32xf32>
    %195 = arith.addf %190, %194 : vector<8x32xf32>
    %196 = math.tanh %195 : vector<8x32xf32>
    %cst_48 = arith.constant 1.000000e+00 : f32
    %197 = vector.broadcast %cst_48 : f32 to vector<8x32xf32>
    %198 = arith.subf %197, %189 : vector<8x32xf32>
    %199 = arith.mulf %198, %196 : vector<8x32xf32>
    %200 = arith.mulf %189, %173 : vector<8x32xf32>
    %201 = arith.addf %199, %200 : vector<8x32xf32>
    %202 = vector.extract_strided_slice %201 {offsets = [0, 0], sizes = [8, 16], strides = [1, 1]} : vector<8x32xf32> to vector<8x16xf32>
    %c48_49 = arith.constant 48 : index
    %c0_50 = arith.constant 0 : index
    %203 = vector.load %arg12[%c48_49, %c0_50] : memref<64x32xf32, #tpu.memory_space<vmem>>, vector<8x16xf32>
    tpu.vector_store %arg12[%c48_49, %c0_50], %202 {strides = array<i32>} : memref<64x32xf32, #tpu.memory_space<vmem>>, vector<8x16xf32>,
    %204 = vector.extract_strided_slice %201 {offsets = [0, 16], sizes = [8, 16], strides = [1, 1]} : vector<8x32xf32> to vector<8x16xf32>
    %c8_51 = arith.constant 8 : index
    %c16_52 = arith.constant 16 : index
    %205 = vector.load %arg12[%c8_51, %c16_52] : memref<64x32xf32, #tpu.memory_space<vmem>>, vector<8x16xf32>
    tpu.vector_store %arg12[%c8_51, %c16_52], %204 {strides = array<i32>} : memref<64x32xf32, #tpu.memory_space<vmem>>, vector<8x16xf32>,
    %206 = vector.extract_strided_slice %6 {offsets = [56, 0], sizes = [8, 96], strides = [1, 1]} : vector<64x96xf32> to vector<8x96xf32>
    %cst_53 = arith.constant dense<0.000000e+00> : vector<8x96xf32>
    %207 = tpu.matmul %201, %7, %cst_53 {dimension_numbers = #tpu.dot_dimension_numbers<[1], [0], [0], [1], [0, 0, 1, 1], [], []>} : vector<8x32xf32>, vector<32x96xf32>, vector<8x96xf32> -> vector<8x96xf32>
    %208 = vector.extract_strided_slice %206 {offsets = [0, 0], sizes = [8, 64], strides = [1, 1]} : vector<8x96xf32> to vector<8x64xf32>
    %209 = vector.extract_strided_slice %207 {offsets = [0, 0], sizes = [8, 64], strides = [1, 1]} : vector<8x96xf32> to vector<8x64xf32>
    %210 = arith.addf %208, %209 : vector<8x64xf32>
    %211 = arith.negf %210 : vector<8x64xf32>
    %212 = math.exp %211 : vector<8x64xf32>
    %cst_54 = arith.constant 1.000000e+00 : f32
    %213 = vector.broadcast %cst_54 : f32 to vector<8x64xf32>
    %214 = arith.addf %213, %212 : vector<8x64xf32>
    %215 = arith.divf %213, %214 : vector<8x64xf32>
    %216 = vector.extract_strided_slice %215 {offsets = [0, 0], sizes = [8, 32], strides = [1, 1]} : vector<8x64xf32> to vector<8x32xf32>
    %217 = vector.extract_strided_slice %215 {offsets = [0, 32], sizes = [8, 32], strides = [1, 1]} : vector<8x64xf32> to vector<8x32xf32>
    %218 = vector.extract_strided_slice %206 {offsets = [0, 64], sizes = [8, 32], strides = [1, 1]} : vector<8x96xf32> to vector<8x32xf32>
    %219 = vector.extract_strided_slice %207 {offsets = [0, 64], sizes = [8, 32], strides = [1, 1]} : vector<8x96xf32> to vector<8x32xf32>
    %220 = vector.broadcast %8 : vector<1x32xf32> to vector<8x32xf32>
    %221 = arith.addf %219, %220 : vector<8x32xf32>
    %222 = arith.mulf %216, %221 : vector<8x32xf32>
    %223 = arith.addf %218, %222 : vector<8x32xf32>
    %224 = math.tanh %223 : vector<8x32xf32>
    %cst_55 = arith.constant 1.000000e+00 : f32
    %225 = vector.broadcast %cst_55 : f32 to vector<8x32xf32>
    %226 = arith.subf %225, %217 : vector<8x32xf32>
    %227 = arith.mulf %226, %224 : vector<8x32xf32>
    %228 = arith.mulf %217, %201 : vector<8x32xf32>
    %229 = arith.addf %227, %228 : vector<8x32xf32>
    %230 = vector.extract_strided_slice %229 {offsets = [0, 0], sizes = [8, 16], strides = [1, 1]} : vector<8x32xf32> to vector<8x16xf32>
    %c56_56 = arith.constant 56 : index
    %c0_57 = arith.constant 0 : index
    %231 = vector.load %arg12[%c56_56, %c0_57] : memref<64x32xf32, #tpu.memory_space<vmem>>, vector<8x16xf32>
    tpu.vector_store %arg12[%c56_56, %c0_57], %230 {strides = array<i32>} : memref<64x32xf32, #tpu.memory_space<vmem>>, vector<8x16xf32>,
    %232 = vector.extract_strided_slice %229 {offsets = [0, 16], sizes = [8, 16], strides = [1, 1]} : vector<8x32xf32> to vector<8x16xf32>
    %c0_58 = arith.constant 0 : index
    %c16_59 = arith.constant 16 : index
    %233 = vector.load %arg12[%c0_58, %c16_59] : memref<64x32xf32, #tpu.memory_space<vmem>>, vector<8x16xf32>
    tpu.vector_store %arg12[%c0_58, %c16_59], %232 {strides = array<i32>} : memref<64x32xf32, #tpu.memory_space<vmem>>, vector<8x16xf32>,
    %c0_60 = arith.constant 0 : index
    %c0_61 = arith.constant 0 : index
    %234 = vector.load %arg12[%c0_60, %c0_61] : memref<64x32xf32, #tpu.memory_space<vmem>>, vector<64x32xf32>
    %c0_62 = arith.constant 0 : index
    %c0_63 = arith.constant 0 : index
    %235 = vector.load %arg6[%c0_62, %c0_63] : memref<32x32xf32, #tpu.memory_space<vmem>>, vector<32x32xf32>
    %cst_64 = arith.constant dense<0.000000e+00> : vector<64x32xf32>
    %236 = tpu.matmul %234, %235, %cst_64 {dimension_numbers = #tpu.dot_dimension_numbers<[1], [0], [0], [1], [0, 0, 1, 1], [], []>} : vector<64x32xf32>, vector<32x32xf32>, vector<64x32xf32> -> vector<64x32xf32>
    %c0_65 = arith.constant 0 : index
    %c0_66 = arith.constant 0 : index
    %237 = vector.load %arg7[%c0_65, %c0_66] : memref<1x32xf32, #tpu.memory_space<vmem>>, vector<1x32xf32>
    %238 = vector.broadcast %237 : vector<1x32xf32> to vector<64x32xf32>
    %239 = arith.addf %236, %238 : vector<64x32xf32>
    %240 = math.tanh %239 : vector<64x32xf32>
    %241 = vector.shape_cast %240 : vector<64x32xf32> to vector<8x8x32xf32>
    %c0_67 = arith.constant 0 : index
    %c0_68 = arith.constant 0 : index
    %c0_69 = arith.constant 0 : index
    %242 = vector.load %arg8[%c0_67, %c0_68, %c0_69] : memref<1x1x32xf32, #tpu.memory_space<vmem>>, vector<1x1x32xf32>
    %243 = vector.broadcast %242 : vector<1x1x32xf32> to vector<8x8x32xf32>
    %244 = arith.mulf %241, %243 : vector<8x8x32xf32>
    %cst_70 = arith.constant dense<0.000000e+00> : vector<8x8xf32>
    %245 = vector.multi_reduction <add>, %244, %cst_70 [2] : vector<8x8x32xf32> to vector<8x8xf32>
    %246 = vector.shape_cast %245 : vector<8x8xf32> to vector<8x8x1xf32>
    %cst_71 = arith.constant dense<0xFF800000> : vector<8x1xf32>
    %247 = vector.multi_reduction <maximumf>, %246, %cst_71 [0] : vector<8x8x1xf32> to vector<8x1xf32>
    %248 = vector.shape_cast %247 : vector<8x1xf32> to vector<1x8x1xf32>
    %249 = vector.broadcast %248 : vector<1x8x1xf32> to vector<8x8x1xf32>
    %250 = arith.subf %246, %249 : vector<8x8x1xf32>
    %251 = math.exp %250 : vector<8x8x1xf32>
    %cst_72 = arith.constant dense<0.000000e+00> : vector<8x1xf32>
    %252 = vector.multi_reduction <add>, %251, %cst_72 [0] : vector<8x8x1xf32> to vector<8x1xf32>
    %253 = vector.shape_cast %252 : vector<8x1xf32> to vector<1x8x1xf32>
    %254 = vector.broadcast %253 : vector<1x8x1xf32> to vector<8x8x1xf32>
    %255 = arith.divf %251, %254 : vector<8x8x1xf32>
    %256 = vector.shape_cast %234 : vector<64x32xf32> to vector<8x8x32xf32>
    %257 = vector.broadcast %255 : vector<8x8x1xf32> to vector<8x8x32xf32>
    %258 = arith.mulf %256, %257 : vector<8x8x32xf32>
    %cst_73 = arith.constant dense<0.000000e+00> : vector<8x32xf32>
    %259 = vector.multi_reduction <add>, %258, %cst_73 [0] : vector<8x8x32xf32> to vector<8x32xf32>
    %c0_74 = arith.constant 0 : index
    %c0_75 = arith.constant 0 : index
    %260 = vector.load %arg9[%c0_74, %c0_75] : memref<32x5xf32, #tpu.memory_space<vmem>>, vector<32x5xf32>
    %cst_76 = arith.constant dense<0.000000e+00> : vector<8x5xf32>
    %261 = tpu.matmul %259, %260, %cst_76 {dimension_numbers = #tpu.dot_dimension_numbers<[1], [0], [0], [1], [0, 0, 1, 1], [], []>} : vector<8x32xf32>, vector<32x5xf32>, vector<8x5xf32> -> vector<8x5xf32>
    %c0_77 = arith.constant 0 : index
    %c0_78 = arith.constant 0 : index
    %262 = vector.load %arg10[%c0_77, %c0_78] : memref<1x5xf32, #tpu.memory_space<vmem>>, vector<1x5xf32>
    %263 = vector.broadcast %262 : vector<1x5xf32> to vector<8x5xf32>
    %264 = arith.addf %261, %263 : vector<8x5xf32>
    %c0_79 = arith.constant 0 : index
    %c0_80 = arith.constant 0 : index
    %265 = vector.load %arg11[%c0_79, %c0_80] : memref<8x5xf32, #tpu.memory_space<vmem>>, vector<8x5xf32>
    tpu.vector_store %arg11[%c0_79, %c0_80], %264 {strides = array<i32>} : memref<8x5xf32, #tpu.memory_space<vmem>>, vector<8x5xf32>,
    return
  }
  func.func @transform_0(%arg0: i32) -> (i32, i32, i32) {
    %c0_i32 = arith.constant 0 : i32
    %c0_i32_0 = arith.constant 0 : i32
    %c0_i32_1 = arith.constant 0 : i32
    return %c0_i32, %arg0, %c0_i32_0 : i32, i32, i32
  }
  func.func @transform_1(%arg0: i32) -> (i32, i32) {
    %c0_i32 = arith.constant 0 : i32
    %c0_i32_0 = arith.constant 0 : i32
    %c0_i32_1 = arith.constant 0 : i32
    return %c0_i32, %c0_i32_0 : i32, i32
  }
  func.func @transform_2(%arg0: i32) -> (i32, i32) {
    %c0_i32 = arith.constant 0 : i32
    %c0_i32_0 = arith.constant 0 : i32
    %c0_i32_1 = arith.constant 0 : i32
    return %c0_i32, %c0_i32_0 : i32, i32
  }
  func.func @transform_3(%arg0: i32) -> (i32, i32) {
    %c0_i32 = arith.constant 0 : i32
    %c0_i32_0 = arith.constant 0 : i32
    %c0_i32_1 = arith.constant 0 : i32
    return %c0_i32, %c0_i32_0 : i32, i32
  }
  func.func @transform_4(%arg0: i32) -> (i32, i32) {
    %c0_i32 = arith.constant 0 : i32
    %c0_i32_0 = arith.constant 0 : i32
    %c0_i32_1 = arith.constant 0 : i32
    return %c0_i32, %c0_i32_0 : i32, i32
  }
  func.func @transform_5(%arg0: i32) -> (i32, i32) {
    %c0_i32 = arith.constant 0 : i32
    %c0_i32_0 = arith.constant 0 : i32
    %c0_i32_1 = arith.constant 0 : i32
    return %c0_i32, %c0_i32_0 : i32, i32
  }
  func.func @transform_6(%arg0: i32) -> (i32, i32) {
    %c0_i32 = arith.constant 0 : i32
    %c0_i32_0 = arith.constant 0 : i32
    %c0_i32_1 = arith.constant 0 : i32
    return %c0_i32, %c0_i32_0 : i32, i32
  }
  func.func @transform_7(%arg0: i32) -> (i32, i32, i32) {
    %c0_i32 = arith.constant 0 : i32
    %c0_i32_0 = arith.constant 0 : i32
    %c0_i32_1 = arith.constant 0 : i32
    %c0_i32_2 = arith.constant 0 : i32
    return %c0_i32, %c0_i32_0, %c0_i32_1 : i32, i32, i32
  }
  func.func @transform_8(%arg0: i32) -> (i32, i32) {
    %c0_i32 = arith.constant 0 : i32
    %c0_i32_0 = arith.constant 0 : i32
    %c0_i32_1 = arith.constant 0 : i32
    return %c0_i32, %c0_i32_0 : i32, i32
  }
  func.func @transform_9(%arg0: i32) -> (i32, i32) {
    %c0_i32 = arith.constant 0 : i32
    %c0_i32_0 = arith.constant 0 : i32
    %c0_i32_1 = arith.constant 0 : i32
    return %c0_i32, %c0_i32_0 : i32, i32
  }
  func.func @transform_10(%arg0: i32) -> (i32, i32) {
    %c0_i32 = arith.constant 0 : i32
    %c0_i32_0 = arith.constant 0 : i32
    return %arg0, %c0_i32 : i32, i32
  }
}

</mosaic_0001>

<llo_original>
// kernel: tpu_custom_call.1
$region0: #{tpu_custom_call.1}
  #allocation0 [shape = 'u32[]', space=smem, size = 0x4, offset = 0x4, fixed_abs, tag = 'smem constant byte address 0x4 - core index']
  #allocation1 [shape = 'u32[144,128]{1,0:T(1,128)}', space=vmem, size = 0x12000, scoped, tag = 'internal scratch']
  #allocation2 [shape = 'f32[64,32]{1,0:T(8,128)}', space=vmem, size = 0x8000, scoped, tag = 'scratch operand']
  %s0 = inlined_call_operand.hbm [shape: f32[8,16,64], index: 0, kind: input, shape index: {}]
  %s1 = inlined_call_operand.hbm [shape: f32[64,96], index: 1, kind: input, shape index: {}]
  %s2 = inlined_call_operand.vmem [shape: f32[1,96], index: 2, kind: input, shape index: {}]
  %s3 = inlined_call_operand.vmem [shape: f32[32,96], index: 3, kind: input, shape index: {}]
  %s4 = inlined_call_operand.vmem [shape: f32[1,32], index: 4, kind: input, shape index: {}]
  %s5 = inlined_call_operand.hbm [shape: f32[32,32], index: 5, kind: input, shape index: {}]
  %s6 = inlined_call_operand.vmem [shape: f32[1,32], index: 6, kind: input, shape index: {}]
  %s7 = inlined_call_operand.vmem [shape: f32[1,1,32], index: 7, kind: input, shape index: {}]
  %s8 = inlined_call_operand.vmem [shape: f32[32,5], index: 8, kind: input, shape index: {}]
  %s9 = inlined_call_operand.vmem [shape: f32[1,5], index: 9, kind: input, shape index: {}]
  %s10 = inlined_call_operand.vmem [shape: f32[16,5], index: 10, kind: output, shape index: {}]
  %s11 = sld [smem:[#allocation0]]
  $region85: #{tpu_custom_call.1} parent=0
    _
  %s13 = ssub.s32 1, %s11
  %s14 = scalar_select 0, %s13, %s11
  $region1: #{tpu_custom_call.1} parent=0
    #allocation3 [shape = 'u8[65536]{0}', space=vmem, size = 0x10000, scoped, tag = 'input window, operand 0']
    #allocation4 [shape = 's32[2]{0}', space=sflag, size = 0x8, scoped, tag = 'scoped memory for tpu_custom_call.1']
    #allocation5 [shape = 'u8[32768]{0}', space=vmem, size = 0x8000, scoped, tag = 'input window, operand 1, single buffered']
    #allocation6 [shape = 's32[1]{0}', space=sflag, size = 0x4, scoped, tag = 'scoped memory for tpu_custom_call.1']
    #allocation7 [shape = 'u8[16384]{0}', space=vmem, size = 0x4000, scoped, tag = 'input window, operand 5, single buffered']
    %15 = vsyncpa [#allocation4], 0
    %s16 = scalar_lea.sflag [#allocation4], 1
    %17 = vsyncpa %s16, 0
    %18 = vsyncpa [#allocation6], 0
    loop: start=0, step=1, limit=4
    $region2: #{tpu_custom_call.1} parent=1 // loop_pre_header
      _
    $region3: #{tpu_custom_call.1} parent=1 // loop_header
      %s20 = sphi 0, %s24
      %p21 = scmp.ge.s32.totalorder %s20, 4
      %s30 = sphi 0, %s32
      %s33 = sphi 0, %s30
      %s34 = sphi 0, %s33
      %s50 = sphi 0, %s34
      %s54 = sphi 0, %s54
      %s56 = sphi 0, %s54
      %s57 = sphi 0, %s56
      %s71 = sphi 0, %s57
      %s75 = sphi 0, %s75
      %s77 = sphi 0, %s75
      %s78 = sphi 0, %s77
      %s92 = sphi 0, %s78
      %s96 = sphi 0, %s96
      %s98 = sphi 0, %s96
      %s99 = sphi 0, %s98
      %s113 = sphi 0, %s99
      %s117 = sphi 0, %s117
      %s119 = sphi 0, %s117
      %s120 = sphi 0, %s119
      %s134 = sphi 0, %s120
      %s138 = sphi 0, %s138
      %s140 = sphi 0, %s138
      %s141 = sphi 0, %s140
      %s155 = sphi 0, %s141
      %s159 = sphi 0, %s159
      %s161 = sphi 0, %s159
      %s162 = sphi 0, %s161
      %s176 = sphi 0, %s162
      %s180 = sphi 0, %s180
      %s182 = sphi 0, %s180
      %s183 = sphi 0, %s182
      %s197 = sphi 0, %s183
      %s201 = sphi 0, %s201
      %s203 = sphi 0, %s201
      %s204 = sphi 0, %s203
      %s218 = sphi 0, %s204
      %s222 = sphi 0, %s222
      %s224 = sphi 0, %s222
      %s225 = sphi 0, %s224
      %s239 = sphi 0, %s225
      %s245 = sphi 0, %s247
      %s248 = sphi 0, %s245
      %s249 = sphi 0, %s248
      %s265 = sphi 0, %s249
    $region4: #{tpu_custom_call.1} parent=1 // loop_header_branch
      %23 = sbr.rel (%p21) target = $region8
    $region5: #{tpu_custom_call.1} parent=1 // loop_body
      %s25 = ssub.s32 %s20, 1
      %s26 = ssub.s32 %s20, 2
      %s27 = sadd.s32 %s20, 1
      %s28 = ssub.s32 %s20, %s27
      %p29 = scmp.eq.s32.totalorder %s28, 0
      %s31 = sadd.s32 %s30, 1
      %s32 = scalar_select %p29, %s30, %s31
      %p35 = pneg %p29
      %p36 = scmp.eq.s32.totalorder %s20, 1
      %p37 = por %p35, %p36
      %p38 = scmp.ne.s32.totalorder %s30, %s33
      %p39 = scmp.eq.s32.totalorder %s20, 0
      %p40 = por %p38, %p39
      %p41 = scmp.ne.s32.totalorder %s30, %s33
      %p42 = scmp.eq.s32.totalorder %s25, 1
      %p43 = por %p41, %p42
      %p44 = scmp.ne.s32.totalorder %s33, %s34
      %p45 = scmp.eq.s32.totalorder %s25, 0
      %p46 = por %p44, %p45
      %p47 = scmp.ne.s32.totalorder %s33, %s34
      %p48 = scmp.eq.s32.totalorder %s26, 1
      %p49 = por %p47, %p48
      %p51 = scmp.ne.s32.totalorder %s34, %s50
      %p52 = scmp.eq.s32.totalorder %s26, 0
      %p53 = por %p51, %p52
      %s55 = sadd.s32 %s54, 1
      %p58 = scmp.eq.s32.totalorder %s20, 1
      %p59 = scmp.ne.s32.totalorder %s54, %s56
      %p60 = scmp.eq.s32.totalorder %s20, 0
      %p61 = por %p59, %p60
      %p62 = scmp.ne.s32.totalorder %s54, %s56
      %p63 = scmp.eq.s32.totalorder %s25, 1
      %p64 = por %p62, %p63
      %p65 = scmp.ne.s32.totalorder %s56, %s57
      %p66 = scmp.eq.s32.totalorder %s25, 0
      %p67 = por %p65, %p66
      %p68 = scmp.ne.s32.totalorder %s56, %s57
      %p69 = scmp.eq.s32.totalorder %s26, 1
      %p70 = por %p68, %p69
      %p72 = scmp.ne.s32.totalorder %s57, %s71
      %p73 = scmp.eq.s32.totalorder %s26, 0
      %p74 = por %p72, %p73
      %s76 = sadd.s32 %s75, 1
      %p79 = scmp.eq.s32.totalorder %s20, 1
      %p80 = scmp.ne.s32.totalorder %s75, %s77
      %p81 = scmp.eq.s32.totalorder %s20, 0
      %p82 = por %p80, %p81
      %p83 = scmp.ne.s32.totalorder %s75, %s77
      %p84 = scmp.eq.s32.totalorder %s25, 1
      %p85 = por %p83, %p84
      %p86 = scmp.ne.s32.totalorder %s77, %s78
      %p87 = scmp.eq.s32.totalorder %s25, 0
      %p88 = por %p86, %p87
      %p89 = scmp.ne.s32.totalorder %s77, %s78
      %p90 = scmp.eq.s32.totalorder %s26, 1
      %p91 = por %p89, %p90
      %p93 = scmp.ne.s32.totalorder %s78, %s92
      %p94 = scmp.eq.s32.totalorder %s26, 0
      %p95 = por %p93, %p94
      %s97 = sadd.s32 %s96, 1
      %p100 = scmp.eq.s32.totalorder %s20, 1
      %p101 = scmp.ne.s32.totalorder %s96, %s98
      %p102 = scmp.eq.s32.totalorder %s20, 0
      %p103 = por %p101, %p102
      %p104 = scmp.ne.s32.totalorder %s96, %s98
      %p105 = scmp.eq.s32.totalorder %s25, 1
      %p106 = por %p104, %p105
      %p107 = scmp.ne.s32.totalorder %s98, %s99
      %p108 = scmp.eq.s32.totalorder %s25, 0
      %p109 = por %p107, %p108
      %p110 = scmp.ne.s32.totalorder %s98, %s99
      %p111 = scmp.eq.s32.totalorder %s26, 1
      %p112 = por %p110, %p111
      %p114 = scmp.ne.s32.totalorder %s99, %s113
      %p115 = scmp.eq.s32.totalorder %s26, 0
      %p116 = por %p114, %p115
      %s118 = sadd.s32 %s117, 1
      %p121 = scmp.eq.s32.totalorder %s20, 1
      %p122 = scmp.ne.s32.totalorder %s117, %s119
      %p123 = scmp.eq.s32.totalorder %s20, 0
      %p124 = por %p122, %p123
      %p125 = scmp.ne.s32.totalorder %s117, %s119
      %p126 = scmp.eq.s32.totalorder %s25, 1
      %p127 = por %p125, %p126
      %p128 = scmp.ne.s32.totalorder %s119, %s120
      %p129 = scmp.eq.s32.totalorder %s25, 0
      %p130 = por %p128, %p129
      %p131 = scmp.ne.s32.totalorder %s119, %s120
      %p132 = scmp.eq.s32.totalorder %s26, 1
      %p133 = por %p131, %p132
      %p135 = scmp.ne.s32.totalorder %s120, %s134
      %p136 = scmp.eq.s32.totalorder %s26, 0
      %p137 = por %p135, %p136
      %s139 = sadd.s32 %s138, 1
      %p142 = scmp.eq.s32.totalorder %s20, 1
      %p143 = scmp.ne.s32.totalorder %s138, %s140
      %p144 = scmp.eq.s32.totalorder %s20, 0
      %p145 = por %p143, %p144
      %p146 = scmp.ne.s32.totalorder %s138, %s140
      %p147 = scmp.eq.s32.totalorder %s25, 1
      %p148 = por %p146, %p147
      %p149 = scmp.ne.s32.totalorder %s140, %s141
      %p150 = scmp.eq.s32.totalorder %s25, 0
      %p151 = por %p149, %p150
      %p152 = scmp.ne.s32.totalorder %s140, %s141
      %p153 = scmp.eq.s32.totalorder %s26, 1
      %p154 = por %p152, %p153
      %p156 = scmp.ne.s32.totalorder %s141, %s155
      %p157 = scmp.eq.s32.totalorder %s26, 0
      %p158 = por %p156, %p157
      %s160 = sadd.s32 %s159, 1
      %p163 = scmp.eq.s32.totalorder %s20, 1
      %p164 = scmp.ne.s32.totalorder %s159, %s161
      %p165 = scmp.eq.s32.totalorder %s20, 0
      %p166 = por %p164, %p165
      %p167 = scmp.ne.s32.totalorder %s159, %s161
      %p168 = scmp.eq.s32.totalorder %s25, 1
      %p169 = por %p167, %p168
      %p170 = scmp.ne.s32.totalorder %s161, %s162
      %p171 = scmp.eq.s32.totalorder %s25, 0
      %p172 = por %p170, %p171
      %p173 = scmp.ne.s32.totalorder %s161, %s162
      %p174 = scmp.eq.s32.totalorder %s26, 1
      %p175 = por %p173, %p174
      %p177 = scmp.ne.s32.totalorder %s162, %s176
      %p178 = scmp.eq.s32.totalorder %s26, 0
      %p179 = por %p177, %p178
      %s181 = sadd.s32 %s180, 1
      %p184 = scmp.eq.s32.totalorder %s20, 1
      %p185 = scmp.ne.s32.totalorder %s180, %s182
      %p186 = scmp.eq.s32.totalorder %s20, 0
      %p187 = por %p185, %p186
      %p188 = scmp.ne.s32.totalorder %s180, %s182
      %p189 = scmp.eq.s32.totalorder %s25, 1
      %p190 = por %p188, %p189
      %p191 = scmp.ne.s32.totalorder %s182, %s183
      %p192 = scmp.eq.s32.totalorder %s25, 0
      %p193 = por %p191, %p192
      %p194 = scmp.ne.s32.totalorder %s182, %s183
      %p195 = scmp.eq.s32.totalorder %s26, 1
      %p196 = por %p194, %p195
      %p198 = scmp.ne.s32.totalorder %s183, %s197
      %p199 = scmp.eq.s32.totalorder %s26, 0
      %p200 = por %p198, %p199
      %s202 = sadd.s32 %s201, 1
      %p205 = scmp.eq.s32.totalorder %s20, 1
      %p206 = scmp.ne.s32.totalorder %s201, %s203
      %p207 = scmp.eq.s32.totalorder %s20, 0
      %p208 = por %p206, %p207
      %p209 = scmp.ne.s32.totalorder %s201, %s203
      %p210 = scmp.eq.s32.totalorder %s25, 1
      %p211 = por %p209, %p210
      %p212 = scmp.ne.s32.totalorder %s203, %s204
      %p213 = scmp.eq.s32.totalorder %s25, 0
      %p214 = por %p212, %p213
      %p215 = scmp.ne.s32.totalorder %s203, %s204
      %p216 = scmp.eq.s32.totalorder %s26, 1
      %p217 = por %p215, %p216
      %p219 = scmp.ne.s32.totalorder %s204, %s218
      %p220 = scmp.eq.s32.totalorder %s26, 0
      %p221 = por %p219, %p220
      %s223 = sadd.s32 %s222, 1
      %p226 = scmp.eq.s32.totalorder %s20, 1
      %p227 = scmp.ne.s32.totalorder %s222, %s224
      %p228 = scmp.eq.s32.totalorder %s20, 0
      %p229 = por %p227, %p228
      %p230 = scmp.ne.s32.totalorder %s222, %s224
      %p231 = scmp.eq.s32.totalorder %s25, 1
      %p232 = por %p230, %p231
      %p233 = scmp.ne.s32.totalorder %s224, %s225
      %p234 = scmp.eq.s32.totalorder %s25, 0
      %p235 = por %p233, %p234
      %p236 = scmp.ne.s32.totalorder %s224, %s225
      %p237 = scmp.eq.s32.totalorder %s26, 1
      %p238 = por %p236, %p237
      %p240 = scmp.ne.s32.totalorder %s225, %s239
      %p241 = scmp.eq.s32.totalorder %s26, 0
      %p242 = por %p240, %p241
      %s243 = ssub.s32 %s20, %s27
      %p244 = scmp.eq.s32.totalorder %s243, 0
      %s246 = sadd.s32 %s245, 1
      %s247 = scalar_select %p244, %s245, %s246
      %p250 = pneg %p244
      %p251 = scmp.eq.s32.totalorder %s20, 1
      %p252 = por %p250, %p251
      %p253 = scmp.ne.s32.totalorder %s245, %s248
      %p254 = scmp.eq.s32.totalorder %s20, 0
      %p255 = por %p253, %p254
      %p256 = scmp.ne.s32.totalorder %s245, %s248
      %p257 = scmp.eq.s32.totalorder %s25, 1
      %p258 = por %p256, %p257
      %p259 = scmp.ne.s32.totalorder %s248, %s249
      %p260 = scmp.eq.s32.totalorder %s25, 0
      %p261 = por %p259, %p260
      %p262 = scmp.ne.s32.totalorder %s248, %s249
      %p263 = scmp.eq.s32.totalorder %s26, 1
      %p264 = por %p262, %p263
      %p266 = scmp.ne.s32.totalorder %s249, %s265
      %p267 = scmp.eq.s32.totalorder %s26, 0
      %p268 = por %p266, %p267
      %p269 = scmp.le.s32.totalorder 1, %s20
      %p270 = scmp.lt.s32.totalorder %s20, 3
      %p271 = pnand %p269, %p270
      %p272 = pneg %p271
      // Predicated region
      $region9: #{tpu_custom_call.1} parent=5 // pred_check
        _
      $region10: #{tpu_custom_call.1} parent=5 // pred_check_branch
        %274 = sbr.rel (%p271) target = $region12
      $region11: #{tpu_custom_call.1} parent=5 // pred_region
        %s275 = ssub.s32 %s20, 1
        // Predicated region
        $region13: #{tpu_custom_call.1} parent=11 // pred_check
          %p276 = pneg %p67
        $region14: #{tpu_custom_call.1} parent=11 // pred_check_branch
          %278 = sbr.rel (%p276) target = $region16
        $region15: #{tpu_custom_call.1} parent=11 // pred_region
          %s280 = ssub.s32 1024, 1024
          %281 = vsyncadd [#allocation6], %s280
          %s282 = sshll.u32 [#allocation5], 4
          %s283 = int_to_ptr.vmem [resolvable:$true] %s282
          %288 = dma.hbm_to_vmem [thread:$0]  %s1, 1024, %s283, [#allocation6], 128, 128, 8
        $region16: #{tpu_custom_call.1} parent=11 // pred_fallthru
          _
        // Predicated region
        $region17: #{tpu_custom_call.1} parent=11 // pred_check
          %p289 = pneg %p88
        $region18: #{tpu_custom_call.1} parent=11 // pred_check_branch
          %291 = sbr.rel (%p289) target = $region20
        $region19: #{tpu_custom_call.1} parent=11 // pred_region
          _
        $region20: #{tpu_custom_call.1} parent=11 // pred_fallthru
          _
        // Predicated region
        $region21: #{tpu_custom_call.1} parent=11 // pred_check
          %p292 = pneg %p109
        $region22: #{tpu_custom_call.1} parent=11 // pred_check_branch
          %294 = sbr.rel (%p292) target = $region24
        $region23: #{tpu_custom_call.1} parent=11 // pred_region
          _
        $region24: #{tpu_custom_call.1} parent=11 // pred_fallthru
          _
        // Predicated region
        $region25: #{tpu_custom_call.1} parent=11 // pred_check
          %p295 = pneg %p130
        $region26: #{tpu_custom_call.1} parent=11 // pred_check_branch
          %297 = sbr.rel (%p295) target = $region28
        $region27: #{tpu_custom_call.1} parent=11 // pred_region
          _
        $region28: #{tpu_custom_call.1} parent=11 // pred_fallthru
          _
        // Predicated region
        $region29: #{tpu_custom_call.1} parent=11 // pred_check
          %p298 = pneg %p151
        $region30: #{tpu_custom_call.1} parent=11 // pred_check_branch
          %300 = sbr.rel (%p298) target = $region32
        $region31: #{tpu_custom_call.1} parent=11 // pred_region
          %s302 = ssub.s32 512, 512
          %303 = vsyncadd [#allocation6], %s302
          %s304 = sshll.u32 [#allocation7], 4
          %s305 = int_to_ptr.vmem [resolvable:$true] %s304
          %310 = dma.hbm_to_vmem [thread:$0]  %s5, 512, %s305, [#allocation6], 128, 128, 8
        $region32: #{tpu_custom_call.1} parent=11 // pred_fallthru
          _
        // Predicated region
        $region33: #{tpu_custom_call.1} parent=11 // pred_check
          %p311 = pneg %p172
        $region34: #{tpu_custom_call.1} parent=11 // pred_check_branch
          %313 = sbr.rel (%p311) target = $region36
        $region35: #{tpu_custom_call.1} parent=11 // pred_region
          _
        $region36: #{tpu_custom_call.1} parent=11 // pred_fallthru
          _
        // Predicated region
        $region37: #{tpu_custom_call.1} parent=11 // pred_check
          %p314 = pneg %p193
        $region38: #{tpu_custom_call.1} parent=11 // pred_check_branch
          %316 = sbr.rel (%p314) target = $region40
        $region39: #{tpu_custom_call.1} parent=11 // pred_region
          _
        $region40: #{tpu_custom_call.1} parent=11 // pred_fallthru
          _
        // Predicated region
        $region41: #{tpu_custom_call.1} parent=11 // pred_check
          %p317 = pneg %p214
        $region42: #{tpu_custom_call.1} parent=11 // pred_check_branch
          %319 = sbr.rel (%p317) target = $region44
        $region43: #{tpu_custom_call.1} parent=11 // pred_region
          _
        $region44: #{tpu_custom_call.1} parent=11 // pred_fallthru
          _
        // Predicated region
        $region45: #{tpu_custom_call.1} parent=11 // pred_check
          %p320 = pneg %p235
        $region46: #{tpu_custom_call.1} parent=11 // pred_check_branch
          %322 = sbr.rel (%p320) target = $region48
        $region47: #{tpu_custom_call.1} parent=11 // pred_region
          _
        $region48: #{tpu_custom_call.1} parent=11 // pred_fallthru
          _
      $region12: #{tpu_custom_call.1} parent=5 // pred_fallthru
        _
      %p323 = scmp.lt.s32.totalorder %s20, 2
      // Predicated region
      $region49: #{tpu_custom_call.1} parent=5 // pred_check
        %p324 = pneg %p323
      $region50: #{tpu_custom_call.1} parent=5 // pred_check_branch
        %326 = sbr.rel (%p324) target = $region52
      $region51: #{tpu_custom_call.1} parent=5 // pred_region
        // Predicated region
        $region53: #{tpu_custom_call.1} parent=51 // pred_check
          %p327 = pneg %p40
        $region54: #{tpu_custom_call.1} parent=51 // pred_check_branch
          %329 = sbr.rel (%p327) target = $region56
        $region55: #{tpu_custom_call.1} parent=51 // pred_region
          %s330 = sand.u32 %s30, 1
          %s331 = scalar_lea.sflag [#allocation4], %s330
          %s332 = sand.u32 %s30, 1
          %s333 = smul.addr %s332, 64
          %s334 = scalar_lea.vmem [#allocation3], %s333
          %s336 = ssub.s32 1024, 1024
          %337 = vsyncadd %s331, %s336
          %s338 = smul.addr %s20, 128
          %s339 = scalar_lea.hbm %s0, %s338
          %s340 = sshll.u32 %s334, 4
          %s341 = int_to_ptr.vmem [resolvable:$true] %s340
          %346 = dma.hbm_to_vmem [thread:$0]  %s339, 1024, %s341, %s331, 256, 128, 8
        $region56: #{tpu_custom_call.1} parent=51 // pred_fallthru
          _
      $region52: #{tpu_custom_call.1} parent=5 // pred_fallthru
        _
      %p347 = scmp.le.s32.totalorder 1, %s20
      %p348 = scmp.lt.s32.totalorder %s20, 3
      %p349 = pnand %p347, %p348
      %p350 = pneg %p349
      // Predicated region
      $region57: #{tpu_custom_call.1} parent=5 // pred_check
        _
      $region58: #{tpu_custom_call.1} parent=5 // pred_check_branch
        %352 = sbr.rel (%p349) target = $region60
      $region59: #{tpu_custom_call.1} parent=5 // pred_region
        %s353 = ssub.s32 %s20, 1
        %s354 = sand.u32 %s33, 1
        %s355 = scalar_lea.sflag [#allocation4], %s354
        %s356 = sand.u32 %s33, 1
        %s357 = smul.addr %s356, 64
        %s358 = scalar_lea.vmem [#allocation3], %s357
        // Predicated region
        $region61: #{tpu_custom_call.1} parent=59 // pred_check
          %p359 = pneg %p46
        $region62: #{tpu_custom_call.1} parent=59 // pred_check_branch
          %361 = sbr.rel (%p359) target = $region64
        $region63: #{tpu_custom_call.1} parent=59 // pred_region
          %362 = dma.done %s355, 1024
        $region64: #{tpu_custom_call.1} parent=59 // pred_fallthru
          _
        // Predicated region
        $region65: #{tpu_custom_call.1} parent=59 // pred_check
          %p363 = pneg %p67
        $region66: #{tpu_custom_call.1} parent=59 // pred_check_branch
          %365 = sbr.rel (%p363) target = $region68
        $region67: #{tpu_custom_call.1} parent=59 // pred_region
          %366 = dma.done [#allocation6], 1024
        $region68: #{tpu_custom_call.1} parent=59 // pred_fallthru
          _
        // Predicated region
        $region69: #{tpu_custom_call.1} parent=59 // pred_check
          %p367 = pneg %p151
        $region70: #{tpu_custom_call.1} parent=59 // pred_check_branch
          %369 = sbr.rel (%p367) target = $region72
        $region71: #{tpu_custom_call.1} parent=59 // pred_region
          %370 = dma.done [#allocation6], 512
        $region72: #{tpu_custom_call.1} parent=59 // pred_fallthru
          _
        %s371 = sand.u32 %s33, 1
        %s372 = scalar_lea.sflag [#allocation4], %s371
        %s373 = sand.u32 %s33, 1
        %s374 = smul.addr %s373, 64
        %s375 = scalar_lea.vmem [#allocation3], %s374
        %p376 = pneg %p46
        %p377 = pneg %p43
        %p378 = pneg %p67
        %p379 = pneg %p64
        %p380 = pneg %p88
        %p381 = pneg %p85
        %p382 = pneg %p109
        %p383 = pneg %p106
        %p384 = pneg %p130
        %p385 = pneg %p127
        %p386 = pneg %p151
        %p387 = pneg %p148
        %p388 = pneg %p172
        %p389 = pneg %p169
        %p390 = pneg %p193
        %p391 = pneg %p190
        %p392 = pneg %p214
        %p393 = pneg %p211
        %p394 = pneg %p235
        %p395 = pneg %p232
        %p396 = pneg %p261
        %p397 = pneg %p258
        %p398 = scmp.lt.s32.totalorder %s25, 1
        %s399 = scalar_select %p398, %s25, 1
        %s400 = smul.addr %s399, 8
        %s401 = scalar_lea.vmem %s10, %s400
        %p402 = scmp.lt.s32.totalorder %s25, 1
        %s403 = scalar_select %p402, %s25, 1
        %s404 = smul.addr %s403, 8
        %s405 = scalar_lea.vmem %s10, %s404
        %v406 = vld [vmem:[%s358] sm:$0xff]
        %v407 = vld [vmem:[%s358 + $0x8] sm:$0xff]
        %v408 = vld [vmem:[%s358 + $0x10] sm:$0xff]
        %v409 = vld [vmem:[%s358 + $0x18] sm:$0xff]
        %v410 = vld [vmem:[%s358 + $0x20] sm:$0xff]
        %v411 = vld [vmem:[%s358 + $0x28] sm:$0xff]
        %v412 = vld [vmem:[%s358 + $0x30] sm:$0xff]
        %v413 = vld [vmem:[%s358 + $0x38] sm:$0xff]
        %v414 = vld [vmem:[#allocation5] sm:$0xff]
        %v415 = vld [vmem:[#allocation5 + $0x8] sm:$0xff]
        %v416 = vld [vmem:[#allocation5 + $0x10] sm:$0xff]
        %v417 = vld [vmem:[#allocation5 + $0x18] sm:$0xff]
        %v418 = vld [vmem:[#allocation5 + $0x20] sm:$0xff]
        %v419 = vld [vmem:[#allocation5 + $0x28] sm:$0xff]
        %v420 = vld [vmem:[#allocation5 + $0x30] sm:$0xff]
        %v421 = vld [vmem:[#allocation5 + $0x38] sm:$0xff]
        %v422 = vld [vmem:[%s2] sm:$0x1]
        %v424 = vlaneseq
        %v425 = vshrl.u32 %v424, 7
        %v426 = vsub.s32 0, %v425
        %v427 = vrot.slane %v422, %v426
        %vm429 = vcmask 523264
        %v431 = vsel %vm429, %v406, 0
        %v434 = vsel %vm429, %v407, 0
        %v437 = vsel %vm429, %v408, 0
        %v440 = vsel %vm429, %v409, 0
        %v443 = vsel %vm429, %v410, 0
        %v446 = vsel %vm429, %v411, 0
        %v449 = vsel %vm429, %v412, 0
        %v452 = vsel %vm429, %v413, 0
        %454 = vmatprep.subr.mxu0 0.0
        %455 = vmatpush1.msra.mxu0 %v414
        %456 = vmatprep.subr.mxu0 0.0
        %457 = vmatpush1.msra.mxu0 %v415
        %458 = vmatprep.subr.mxu0 0.0
        %459 = vmatpush1.msra.mxu0 %v416
        %460 = vmatprep.subr.mxu0 0.0
        %461 = vmatpush1.msra.mxu0 %v417
        %462 = vmatprep.subr.mxu0 0.0
        %463 = vmatpush1.msra.mxu0 %v418
        %464 = vmatprep.subr.mxu0 0.0
        %465 = vmatpush1.msra.mxu0 %v419
        %466 = vmatprep.subr.mxu0 0.0
        %467 = vmatpush1.msra.mxu0 %v420
        %468 = vmatprep.subr.mxu0 0.0
        %469 = vmatpush1.msra.mxu0 %v421
        %470 = vmatprep.subr.mxu0 0.0
        %471 = vmatpush1.msra.mxu0 0.0
        %472 = vmatprep.subr.mxu0 0.0
        %473 = vmatpush1.msra.mxu0 0.0
        %474 = vmatprep.subr.mxu0 0.0
        %475 = vmatpush1.msra.mxu0 0.0
        %476 = vmatprep.subr.mxu0 0.0
        %477 = vmatpush1.msra.mxu0 0.0
        %478 = vmatprep.subr.mxu0 0.0
        %479 = vmatpush1.msra.mxu0 0.0
        %480 = vmatprep.subr.mxu0 0.0
        %481 = vmatpush1.msra.mxu0 0.0
        %482 = vmatprep.subr.mxu0 0.0
        %483 = vmatpush1.msra.mxu0 0.0
        %484 = vmatprep.subr.mxu0 0.0
        %485 = vmatpush1.msra.mxu0 0.0
        %486 = vmatprep.subr.mxu0 0.0
        %487 = vmatpush1.msra.mxu0 0.0
        %488 = vmatprep.subr.mxu0 0.0
        %489 = vmatpush1.msra.mxu0 0.0
        %490 = vmatprep.subr.mxu0 0.0
        %491 = vmatpush1.msra.mxu0 0.0
        %492 = vmatprep.subr.mxu0 0.0
        %493 = vmatpush1.msra.mxu0 0.0
        %494 = vmatprep.subr.mxu0 0.0
        %495 = vmatpush1.msra.mxu0 0.0
        %496 = vmatprep.subr.mxu0 0.0
        %497 = vmatpush1.msra.mxu0 0.0
        %498 = vmatprep.subr.mxu0 0.0
        %499 = vmatpush1.msra.mxu0 0.0
        %500 = vmatprep.subr.mxu0 0.0
        %501 = vmatpush1.msra.mxu0 0.0
        %502 = vmatprep.subr.mxu0 0.0
        %503 = vmatpush1.msra.mxu0 0.0
        %504 = vmatprep.subr.mxu0 0.0
        %505 = vmatpush1.msra.mxu0 0.0
        %506 = vmatprep.subr.mxu0 0.0
        %507 = vmatpush1.msra.mxu0 0.0
        %508 = vmatprep.subr.mxu0 0.0
        %509 = vmatpush1.msra.mxu0 0.0
        %510 = vmatprep.subr.mxu0 0.0
        %511 = vmatpush1.msra.mxu0 0.0
        %512 = vmatprep.subr.mxu0 0.0
        %513 = vmatpush1.msra.mxu0 0.0
        %514 = vmatprep.subr.mxu0 0.0
        %515 = vmatpush1.msra.mxu0 0.0
        %516 = vmatprep.subr.mxu0 0.0
        %517 = vmatpush1.msra.mxu0 0.0
        %518 = vmatprep.mubr.f32.mxu0 0.0
        %519 = vmatmul.mubr.f32.gmra.mrb[0].mxu0 %v431
        %v520 = vpop.f32.mrb[0].mxu0
        %v521 = vadd.f32 %v427, %v520
        %v522 = vpop.f32.mrb[0].mxu0
        %523 = vmatprep.mubr.f32.mxu0 0.0
        %524 = vmatmul.mubr.f32.gmra.mrb[0].mxu0 %v434
        %v525 = vpop.f32.mrb[0].mxu0
        %v526 = vadd.f32 %v427, %v525
        %v527 = vpop.f32.mrb[0].mxu0
        %528 = vmatprep.mubr.f32.mxu0 0.0
        %529 = vmatmul.mubr.f32.gmra.mrb[0].mxu0 %v437
        %v530 = vpop.f32.mrb[0].mxu0
        %v531 = vadd.f32 %v427, %v530
        %v532 = vpop.f32.mrb[0].mxu0
        %533 = vmatprep.mubr.f32.mxu0 0.0
        %534 = vmatmul.mubr.f32.gmra.mrb[0].mxu0 %v440
        %v535 = vpop.f32.mrb[0].mxu0
        %v536 = vadd.f32 %v427, %v535
        %v537 = vpop.f32.mrb[0].mxu0
        %538 = vmatprep.mubr.f32.mxu0 0.0
        %539 = vmatmul.mubr.f32.gmra.mrb[0].mxu0 %v443
        %v540 = vpop.f32.mrb[0].mxu0
        %v541 = vadd.f32 %v427, %v540
        %v542 = vpop.f32.mrb[0].mxu0
        %543 = vmatprep.mubr.f32.mxu0 0.0
        %544 = vmatmul.mubr.f32.gmra.mrb[0].mxu0 %v446
        %v545 = vpop.f32.mrb[0].mxu0
        %v546 = vadd.f32 %v427, %v545
        %v547 = vpop.f32.mrb[0].mxu0
        %548 = vmatprep.mubr.f32.mxu0 0.0
        %549 = vmatmul.mubr.f32.gmra.mrb[0].mxu0 %v449
        %v550 = vpop.f32.mrb[0].mxu0
        %v551 = vadd.f32 %v427, %v550
        %v552 = vpop.f32.mrb[0].mxu0
        %553 = vmatprep.mubr.f32.mxu0 0.0
        %554 = vmatmul.mubr.f32.gmra.mrb[0].mxu0 %v452
        %v555 = vpop.f32.mrb[0].mxu0
        %v556 = vadd.f32 %v427, %v555
        %v557 = vpop.f32.mrb[0].mxu0
        %558 = vdwg.mxu0
        %v559 = vld [vmem:[%s3] sm:$0xff]
        %v560 = vld [vmem:[%s3 + $0x8] sm:$0xff]
        %v561 = vld [vmem:[%s3 + $0x10] sm:$0xff]
        %v562 = vld [vmem:[%s3 + $0x18] sm:$0xff]
        %v563 = vld [vmem:[%s4] sm:$0x1]
        %vm564 = vcmask 261120
        %v566 = vsel %vm564, 0.0, 0
        %568 = vmatprep.subr.mxu0 0.0
        %569 = vmatpush1.msra.mxu0 %v559
        %570 = vmatprep.subr.mxu0 0.0
        %571 = vmatpush1.msra.mxu0 %v560
        %572 = vmatprep.subr.mxu0 0.0
        %573 = vmatpush1.msra.mxu0 %v561
        %574 = vmatprep.subr.mxu0 0.0
        %575 = vmatpush1.msra.mxu0 %v562
        %576 = vmatprep.subr.mxu0 0.0
        %577 = vmatpush1.msra.mxu0 0.0
        %578 = vmatprep.subr.mxu0 0.0
        %579 = vmatpush1.msra.mxu0 0.0
        %580 = vmatprep.subr.mxu0 0.0
        %581 = vmatpush1.msra.mxu0 0.0
        %582 = vmatprep.subr.mxu0 0.0
        %583 = vmatpush1.msra.mxu0 0.0
        %584 = vmatprep.subr.mxu0 0.0
        %585 = vmatpush1.msra.mxu0 0.0
        %586 = vmatprep.subr.mxu0 0.0
        %587 = vmatpush1.msra.mxu0 0.0
        %588 = vmatprep.subr.mxu0 0.0
        %589 = vmatpush1.msra.mxu0 0.0
        %590 = vmatprep.subr.mxu0 0.0
        %591 = vmatpush1.msra.mxu0 0.0
        %592 = vmatprep.subr.mxu0 0.0
        %593 = vmatpush1.msra.mxu0 0.0
        %594 = vmatprep.subr.mxu0 0.0
        %595 = vmatpush1.msra.mxu0 0.0
        %596 = vmatprep.subr.mxu0 0.0
        %597 = vmatpush1.msra.mxu0 0.0
        %598 = vmatprep.subr.mxu0 0.0
        %599 = vmatpush1.msra.mxu0 0.0
        %600 = vmatprep.subr.mxu0 0.0
        %601 = vmatpush1.msra.mxu0 0.0
        %602 = vmatprep.subr.mxu0 0.0
        %603 = vmatpush1.msra.mxu0 0.0
        %604 = vmatprep.subr.mxu0 0.0
        %605 = vmatpush1.msra.mxu0 0.0
        %606 = vmatprep.subr.mxu0 0.0
        %607 = vmatpush1.msra.mxu0 0.0
        %608 = vmatprep.subr.mxu0 0.0
        %609 = vmatpush1.msra.mxu0 0.0
        %610 = vmatprep.subr.mxu0 0.0
        %611 = vmatpush1.msra.mxu0 0.0
        %612 = vmatprep.subr.mxu0 0.0
        %613 = vmatpush1.msra.mxu0 0.0
        %614 = vmatprep.subr.mxu0 0.0
        %615 = vmatpush1.msra.mxu0 0.0
        %616 = vmatprep.subr.mxu0 0.0
        %617 = vmatpush1.msra.mxu0 0.0
        %618 = vmatprep.subr.mxu0 0.0
        %619 = vmatpush1.msra.mxu0 0.0
        %620 = vmatprep.subr.mxu0 0.0
        %621 = vmatpush1.msra.mxu0 0.0
        %622 = vmatprep.subr.mxu0 0.0
        %623 = vmatpush1.msra.mxu0 0.0
        %624 = vmatprep.subr.mxu0 0.0
        %625 = vmatpush1.msra.mxu0 0.0
        %626 = vmatprep.subr.mxu0 0.0
        %627 = vmatpush1.msra.mxu0 0.0
        %628 = vmatprep.subr.mxu0 0.0
        %629 = vmatpush1.msra.mxu0 0.0
        %630 = vmatprep.subr.mxu0 0.0
        %631 = vmatpush1.msra.mxu0 0.0
        %632 = vmatprep.mubr.f32.mxu0 0.0
        %633 = vmatmul.mubr.f32.gmra.mrb[0].mxu0 %v566
        %v634 = vpop.f32.mrb[0].mxu0
        %v635 = vadd.f32 0.0, %v634
        %v636 = vpop.f32.mrb[0].mxu0
        %637 = vdwg.mxu0
        %v638 = vadd.f32 %v521, %v635
        %v639 = vxor.u32 %v638, 2147483648
        %v640 = vmul.f32 %v639, 1.442695
        %v641 = vpow.pop %v640
        %v642 = vadd.f32 %v641, 1.0
        %v643 = vrcp.pop %v642
        %v644 = vmul.f32 1.0, %v643
        %v646 = vlaneseq
        %v647 = vshrl.u32 %v646, 7
        %v648 = vsub.s32 0, %v647
        %v649 = vrot.slane %v563, %v648
        %650 = vrot.lane.b32.xlu0 %v649, 64
        %v651 = vpop.permute.xlu0 %650
        %v653 = vadd.f32 %v635, %v651
        %655 = vrot.lane.b32.xlu0 %v653, 64
        %v656 = vpop.permute.xlu0 %655
        %v658 = vmul.f32 %v644, %v656
        %660 = vrot.lane.b32.xlu0 %v658, 64
        %v661 = vpop.permute.xlu0 %660
        %v663 = vadd.f32 %v521, %v661
        %v664 = vtanh.pop %v663
        %v665 = vsub.f32 1.0, %v644
        %667 = vrot.lane.b32.xlu0 %v664, 96
        %v668 = vpop.permute.xlu0 %667
        %v670 = vmul.f32 %v665, %v668
        %v671 = vmul.f32 %v644, 0.0
        %v672 = vadd.f32 %v670, %v671
        %674 = vrot.lane.b32.xlu0 %v672, 96
        %v675 = vpop.permute.xlu0 %674
        %vm677 = vcmask 130048
        %678 = vst.msk [vmem:[#allocation2] sm:$0xff] %vm677, %v675
        %vm679 = vcmask 261248
        %680 = vst.msk [vmem:[#allocation2 + $0x38] sm:$0xff] %vm679, %v675
        %v681 = vsel %vm564, %v675, 0
        %683 = vmatprep.subr.mxu0 0.0
        %684 = vmatpush1.msra.mxu0 %v559
        %685 = vmatprep.subr.mxu0 0.0
        %686 = vmatpush1.msra.mxu0 %v560
        %687 = vmatprep.subr.mxu0 0.0
        %688 = vmatpush1.msra.mxu0 %v561
        %689 = vmatprep.subr.mxu0 0.0
        %690 = vmatpush1.msra.mxu0 %v562
        %691 = vmatprep.subr.mxu0 0.0
        %692 = vmatpush1.msra.mxu0 0.0
        %693 = vmatprep.subr.mxu0 0.0
        %694 = vmatpush1.msra.mxu0 0.0
        %695 = vmatprep.subr.mxu0 0.0
        %696 = vmatpush1.msra.mxu0 0.0
        %697 = vmatprep.subr.mxu0 0.0
        %698 = vmatpush1.msra.mxu0 0.0
        %699 = vmatprep.subr.mxu0 0.0
        %700 = vmatpush1.msra.mxu0 0.0
        %701 = vmatprep.subr.mxu0 0.0
        %702 = vmatpush1.msra.mxu0 0.0
        %703 = vmatprep.subr.mxu0 0.0
        %704 = vmatpush1.msra.mxu0 0.0
        %705 = vmatprep.subr.mxu0 0.0
        %706 = vmatpush1.msra.mxu0 0.0
        %707 = vmatprep.subr.mxu0 0.0
        %708 = vmatpush1.msra.mxu0 0.0
        %709 = vmatprep.subr.mxu0 0.0
        %710 = vmatpush1.msra.mxu0 0.0
        %711 = vmatprep.subr.mxu0 0.0
        %712 = vmatpush1.msra.mxu0 0.0
        %713 = vmatprep.subr.mxu0 0.0
        %714 = vmatpush1.msra.mxu0 0.0
        %715 = vmatprep.subr.mxu0 0.0
        %716 = vmatpush1.msra.mxu0 0.0
        %717 = vmatprep.subr.mxu0 0.0
        %718 = vmatpush1.msra.mxu0 0.0
        %719 = vmatprep.subr.mxu0 0.0
        %720 = vmatpush1.msra.mxu0 0.0
        %721 = vmatprep.subr.mxu0 0.0
        %722 = vmatpush1.msra.mxu0 0.0
        %723 = vmatprep.subr.mxu0 0.0
        %724 = vmatpush1.msra.mxu0 0.0
        %725 = vmatprep.subr.mxu0 0.0
        %726 = vmatpush1.msra.mxu0 0.0
        %727 = vmatprep.subr.mxu0 0.0
        %728 = vmatpush1.msra.mxu0 0.0
        %729 = vmatprep.subr.mxu0 0.0
        %730 = vmatpush1.msra.mxu0 0.0
        %731 = vmatprep.subr.mxu0 0.0
        %732 = vmatpush1.msra.mxu0 0.0
        %733 = vmatprep.subr.mxu0 0.0
        %734 = vmatpush1.msra.mxu0 0.0
        %735 = vmatprep.subr.mxu0 0.0
        %736 = vmatpush1.msra.mxu0 0.0
        %737 = vmatprep.subr.mxu0 0.0
        %738 = vmatpush1.msra.mxu0 0.0
        %739 = vmatprep.subr.mxu0 0.0
        %740 = vmatpush1.msra.mxu0 0.0
        %741 = vmatprep.subr.mxu0 0.0
        %742 = vmatpush1.msra.mxu0 0.0
        %743 = vmatprep.subr.mxu0 0.0
        %744 = vmatpush1.msra.mxu0 0.0
        %745 = vmatprep.subr.mxu0 0.0
        %746 = vmatpush1.msra.mxu0 0.0
        %747 = vmatprep.mubr.f32.mxu0 0.0
        %748 = vmatmul.mubr.f32.gmra.mrb[0].mxu0 %v681
        %v749 = vpop.f32.mrb[0].mxu0
        %v750 = vadd.f32 0.0, %v749
        %v751 = vpop.f32.mrb[0].mxu0
        %752 = vdwg.mxu0
        %v753 = vadd.f32 %v526, %v750
        %v754 = vxor.u32 %v753, 2147483648
        %v755 = vmul.f32 %v754, 1.442695
        %v756 = vpow.pop %v755
        %v757 = vadd.f32 %v756, 1.0
        %v758 = vrcp.pop %v757
        %v759 = vmul.f32 1.0, %v758
        %v760 = vadd.f32 %v750, %v651
        %762 = vrot.lane.b32.xlu0 %v760, 64
        %v763 = vpop.permute.xlu0 %762
        %v765 = vmul.f32 %v759, %v763
        %767 = vrot.lane.b32.xlu0 %v765, 64
        %v768 = vpop.permute.xlu0 %767
        %v770 = vadd.f32 %v526, %v768
        %v771 = vtanh.pop %v770
        %v772 = vsub.f32 1.0, %v759
        %774 = vrot.lane.b32.xlu0 %v771, 96
        %v775 = vpop.permute.xlu0 %774
        %v777 = vmul.f32 %v772, %v775
        %v778 = vmul.f32 %v759, %v672
        %v779 = vadd.f32 %v777, %v778
        %781 = vrot.lane.b32.xlu0 %v779, 96
        %v782 = vpop.permute.xlu0 %781
        %784 = vst.msk [vmem:[#allocation2 + $0x8] sm:$0xff] %vm677, %v782
        %785 = vst.msk [vmem:[#allocation2 + $0x30] sm:$0xff] %vm679, %v782
        %v786 = vsel %vm564, %v782, 0
        %788 = vmatprep.subr.mxu0 0.0
        %789 = vmatpush1.msra.mxu0 %v559
        %790 = vmatprep.subr.mxu0 0.0
        %791 = vmatpush1.msra.mxu0 %v560
        %792 = vmatprep.subr.mxu0 0.0
        %793 = vmatpush1.msra.mxu0 %v561
        %794 = vmatprep.subr.mxu0 0.0
        %795 = vmatpush1.msra.mxu0 %v562
        %796 = vmatprep.subr.mxu0 0.0
        %797 = vmatpush1.msra.mxu0 0.0
        %798 = vmatprep.subr.mxu0 0.0
        %799 = vmatpush1.msra.mxu0 0.0
        %800 = vmatprep.subr.mxu0 0.0
        %801 = vmatpush1.msra.mxu0 0.0
        %802 = vmatprep.subr.mxu0 0.0
        %803 = vmatpush1.msra.mxu0 0.0
        %804 = vmatprep.subr.mxu0 0.0
        %805 = vmatpush1.msra.mxu0 0.0
        %806 = vmatprep.subr.mxu0 0.0
        %807 = vmatpush1.msra.mxu0 0.0
        %808 = vmatprep.subr.mxu0 0.0
        %809 = vmatpush1.msra.mxu0 0.0
        %810 = vmatprep.subr.mxu0 0.0
        %811 = vmatpush1.msra.mxu0 0.0
        %812 = vmatprep.subr.mxu0 0.0
        %813 = vmatpush1.msra.mxu0 0.0
        %814 = vmatprep.subr.mxu0 0.0
        %815 = vmatpush1.msra.mxu0 0.0
        %816 = vmatprep.subr.mxu0 0.0
        %817 = vmatpush1.msra.mxu0 0.0
        %818 = vmatprep.subr.mxu0 0.0
        %819 = vmatpush1.msra.mxu0 0.0
        %820 = vmatprep.subr.mxu0 0.0
        %821 = vmatpush1.msra.mxu0 0.0
        %822 = vmatprep.subr.mxu0 0.0
        %823 = vmatpush1.msra.mxu0 0.0
        %824 = vmatprep.subr.mxu0 0.0
        %825 = vmatpush1.msra.mxu0 0.0
        %826 = vmatprep.subr.mxu0 0.0
        %827 = vmatpush1.msra.mxu0 0.0
        %828 = vmatprep.subr.mxu0 0.0
        %829 = vmatpush1.msra.mxu0 0.0
        %830 = vmatprep.subr.mxu0 0.0
        %831 = vmatpush1.msra.mxu0 0.0
        %832 = vmatprep.subr.mxu0 0.0
        %833 = vmatpush1.msra.mxu0 0.0
        %834 = vmatprep.subr.mxu0 0.0
        %835 = vmatpush1.msra.mxu0 0.0
        %836 = vmatprep.subr.mxu0 0.0
        %837 = vmatpush1.msra.mxu0 0.0
        %838 = vmatprep.subr.mxu0 0.0
        %839 = vmatpush1.msra.mxu0 0.0
        %840 = vmatprep.subr.mxu0 0.0
        %841 = vmatpush1.msra.mxu0 0.0
        %842 = vmatprep.subr.mxu0 0.0
        %843 = vmatpush1.msra.mxu0 0.0
        %844 = vmatprep.subr.mxu0 0.0
        %845 = vmatpush1.msra.mxu0 0.0
        %846 = vmatprep.subr.mxu0 0.0
        %847 = vmatpush1.msra.mxu0 0.0
        %848 = vmatprep.subr.mxu0 0.0
        %849 = vmatpush1.msra.mxu0 0.0
        %850 = vmatprep.subr.mxu0 0.0
        %851 = vmatpush1.msra.mxu0 0.0
        %852 = vmatprep.mubr.f32.mxu0 0.0
        %853 = vmatmul.mubr.f32.gmra.mrb[0].mxu0 %v786
        %v854 = vpop.f32.mrb[0].mxu0
        %v855 = vadd.f32 0.0, %v854
        %v856 = vpop.f32.mrb[0].mxu0
        %857 = vdwg.mxu0
        %v858 = vadd.f32 %v531, %v855
        %v859 = vxor.u32 %v858, 2147483648
        %v860 = vmul.f32 %v859, 1.442695
        %v861 = vpow.pop %v860
        %v862 = vadd.f32 %v861, 1.0
        %v863 = vrcp.pop %v862
        %v864 = vmul.f32 1.0, %v863
        %v865 = vadd.f32 %v855, %v651
        %867 = vrot.lane.b32.xlu0 %v865, 64
        %v868 = vpop.permute.xlu0 %867
        %v870 = vmul.f32 %v864, %v868
        %872 = vrot.lane.b32.xlu0 %v870, 64
        %v873 = vpop.permute.xlu0 %872
        %v875 = vadd.f32 %v531, %v873
        %v876 = vtanh.pop %v875
        %v877 = vsub.f32 1.0, %v864
        %879 = vrot.lane.b32.xlu0 %v876, 96
        %v880 = vpop.permute.xlu0 %879
        %v882 = vmul.f32 %v877, %v880
        %v883 = vmul.f32 %v864, %v779
        %v884 = vadd.f32 %v882, %v883
        %886 = vrot.lane.b32.xlu0 %v884, 96
        %v887 = vpop.permute.xlu0 %886
        %889 = vst.msk [vmem:[#allocation2 + $0x10] sm:$0xff] %vm677, %v887
        %890 = vst.msk [vmem:[#allocation2 + $0x28] sm:$0xff] %vm679, %v887
        %v891 = vsel %vm564, %v887, 0
        %893 = vmatprep.subr.mxu0 0.0
        %894 = vmatpush1.msra.mxu0 %v559
        %895 = vmatprep.subr.mxu0 0.0
        %896 = vmatpush1.msra.mxu0 %v560
        %897 = vmatprep.subr.mxu0 0.0
        %898 = vmatpush1.msra.mxu0 %v561
        %899 = vmatprep.subr.mxu0 0.0
        %900 = vmatpush1.msra.mxu0 %v562
        %901 = vmatprep.subr.mxu0 0.0
        %902 = vmatpush1.msra.mxu0 0.0
        %903 = vmatprep.subr.mxu0 0.0
        %904 = vmatpush1.msra.mxu0 0.0
        %905 = vmatprep.subr.mxu0 0.0
        %906 = vmatpush1.msra.mxu0 0.0
        %907 = vmatprep.subr.mxu0 0.0
        %908 = vmatpush1.msra.mxu0 0.0
        %909 = vmatprep.subr.mxu0 0.0
        %910 = vmatpush1.msra.mxu0 0.0
        %911 = vmatprep.subr.mxu0 0.0
        %912 = vmatpush1.msra.mxu0 0.0
        %913 = vmatprep.subr.mxu0 0.0
        %914 = vmatpush1.msra.mxu0 0.0
        %915 = vmatprep.subr.mxu0 0.0
        %916 = vmatpush1.msra.mxu0 0.0
        %917 = vmatprep.subr.mxu0 0.0
        %918 = vmatpush1.msra.mxu0 0.0
        %919 = vmatprep.subr.mxu0 0.0
        %920 = vmatpush1.msra.mxu0 0.0
        %921 = vmatprep.subr.mxu0 0.0
        %922 = vmatpush1.msra.mxu0 0.0
        %923 = vmatprep.subr.mxu0 0.0
        %924 = vmatpush1.msra.mxu0 0.0
        %925 = vmatprep.subr.mxu0 0.0
        %926 = vmatpush1.msra.mxu0 0.0
        %927 = vmatprep.subr.mxu0 0.0
        %928 = vmatpush1.msra.mxu0 0.0
        %929 = vmatprep.subr.mxu0 0.0
        %930 = vmatpush1.msra.mxu0 0.0
        %931 = vmatprep.subr.mxu0 0.0
        %932 = vmatpush1.msra.mxu0 0.0
        %933 = vmatprep.subr.mxu0 0.0
        %934 = vmatpush1.msra.mxu0 0.0
        %935 = vmatprep.subr.mxu0 0.0
        %936 = vmatpush1.msra.mxu0 0.0
        %937 = vmatprep.subr.mxu0 0.0
        %938 = vmatpush1.msra.mxu0 0.0
        %939 = vmatprep.subr.mxu0 0.0
        %940 = vmatpush1.msra.mxu0 0.0
        %941 = vmatprep.subr.mxu0 0.0
        %942 = vmatpush1.msra.mxu0 0.0
        %943 = vmatprep.subr.mxu0 0.0
        %944 = vmatpush1.msra.mxu0 0.0
        %945 = vmatprep.subr.mxu0 0.0
        %946 = vmatpush1.msra.mxu0 0.0
        %947 = vmatprep.subr.mxu0 0.0
        %948 = vmatpush1.msra.mxu0 0.0
        %949 = vmatprep.subr.mxu0 0.0
        %950 = vmatpush1.msra.mxu0 0.0
        %951 = vmatprep.subr.mxu0 0.0
        %952 = vmatpush1.msra.mxu0 0.0
        %953 = vmatprep.subr.mxu0 0.0
        %954 = vmatpush1.msra.mxu0 0.0
        %955 = vmatprep.subr.mxu0 0.0
        %956 = vmatpush1.msra.mxu0 0.0
        %957 = vmatprep.mubr.f32.mxu0 0.0
        %958 = vmatmul.mubr.f32.gmra.mrb[0].mxu0 %v891
        %v959 = vpop.f32.mrb[0].mxu0
        %v960 = vadd.f32 0.0, %v959
        %v961 = vpop.f32.mrb[0].mxu0
        %962 = vdwg.mxu0
        %v963 = vadd.f32 %v536, %v960
        %v964 = vxor.u32 %v963, 2147483648
        %v965 = vmul.f32 %v964, 1.442695
        %v966 = vpow.pop %v965
        %v967 = vadd.f32 %v966, 1.0
        %v968 = vrcp.pop %v967
        %v969 = vmul.f32 1.0, %v968
        %v970 = vadd.f32 %v960, %v651
        %972 = vrot.lane.b32.xlu0 %v970, 64
        %v973 = vpop.permute.xlu0 %972
        %v975 = vmul.f32 %v969, %v973
        %977 = vrot.lane.b32.xlu0 %v975, 64
        %v978 = vpop.permute.xlu0 %977
        %v980 = vadd.f32 %v536, %v978
        %v981 = vtanh.pop %v980
        %v982 = vsub.f32 1.0, %v969
        %984 = vrot.lane.b32.xlu0 %v981, 96
        %v985 = vpop.permute.xlu0 %984
        %v987 = vmul.f32 %v982, %v985
        %v988 = vmul.f32 %v969, %v884
        %v989 = vadd.f32 %v987, %v988
        %991 = vrot.lane.b32.xlu0 %v989, 96
        %v992 = vpop.permute.xlu0 %991
        %994 = vst.msk [vmem:[#allocation2 + $0x18] sm:$0xff] %vm677, %v992
        %995 = vst.msk [vmem:[#allocation2 + $0x20] sm:$0xff] %vm679, %v992
        %v996 = vsel %vm564, %v992, 0
        %998 = vmatprep.subr.mxu0 0.0
        %999 = vmatpush1.msra.mxu0 %v559
        %1000 = vmatprep.subr.mxu0 0.0
        %1001 = vmatpush1.msra.mxu0 %v560
        %1002 = vmatprep.subr.mxu0 0.0
        %1003 = vmatpush1.msra.mxu0 %v561
        %1004 = vmatprep.subr.mxu0 0.0
        %1005 = vmatpush1.msra.mxu0 %v562
        %1006 = vmatprep.subr.mxu0 0.0
        %1007 = vmatpush1.msra.mxu0 0.0
        %1008 = vmatprep.subr.mxu0 0.0
        %1009 = vmatpush1.msra.mxu0 0.0
        %1010 = vmatprep.subr.mxu0 0.0
        %1011 = vmatpush1.msra.mxu0 0.0
        %1012 = vmatprep.subr.mxu0 0.0
        %1013 = vmatpush1.msra.mxu0 0.0
        %1014 = vmatprep.subr.mxu0 0.0
        %1015 = vmatpush1.msra.mxu0 0.0
        %1016 = vmatprep.subr.mxu0 0.0
        %1017 = vmatpush1.msra.mxu0 0.0
        %1018 = vmatprep.subr.mxu0 0.0
        %1019 = vmatpush1.msra.mxu0 0.0
        %1020 = vmatprep.subr.mxu0 0.0
        %1021 = vmatpush1.msra.mxu0 0.0
        %1022 = vmatprep.subr.mxu0 0.0
        %1023 = vmatpush1.msra.mxu0 0.0
        %1024 = vmatprep.subr.mxu0 0.0
        %1025 = vmatpush1.msra.mxu0 0.0
        %1026 = vmatprep.subr.mxu0 0.0
        %1027 = vmatpush1.msra.mxu0 0.0
        %1028 = vmatprep.subr.mxu0 0.0
        %1029 = vmatpush1.msra.mxu0 0.0
        %1030 = vmatprep.subr.mxu0 0.0
        %1031 = vmatpush1.msra.mxu0 0.0
        %1032 = vmatprep.subr.mxu0 0.0
        %1033 = vmatpush1.msra.mxu0 0.0
        %1034 = vmatprep.subr.mxu0 0.0
        %1035 = vmatpush1.msra.mxu0 0.0
        %1036 = vmatprep.subr.mxu0 0.0
        %1037 = vmatpush1.msra.mxu0 0.0
        %1038 = vmatprep.subr.mxu0 0.0
        %1039 = vmatpush1.msra.mxu0 0.0
        %1040 = vmatprep.subr.mxu0 0.0
        %1041 = vmatpush1.msra.mxu0 0.0
        %1042 = vmatprep.subr.mxu0 0.0
        %1043 = vmatpush1.msra.mxu0 0.0
        %1044 = vmatprep.subr.mxu0 0.0
        %1045 = vmatpush1.msra.mxu0 0.0
        %1046 = vmatprep.subr.mxu0 0.0
        %1047 = vmatpush1.msra.mxu0 0.0
        %1048 = vmatprep.subr.mxu0 0.0
        %1049 = vmatpush1.msra.mxu0 0.0
        %1050 = vmatprep.subr.mxu0 0.0
        %1051 = vmatpush1.msra.mxu0 0.0
        %1052 = vmatprep.subr.mxu0 0.0
        %1053 = vmatpush1.msra.mxu0 0.0
        %1054 = vmatprep.subr.mxu0 0.0
        %1055 = vmatpush1.msra.mxu0 0.0
        %1056 = vmatprep.subr.mxu0 0.0
        %1057 = vmatpush1.msra.mxu0 0.0
        %1058 = vmatprep.subr.mxu0 0.0
        %1059 = vmatpush1.msra.mxu0 0.0
        %1060 = vmatprep.subr.mxu0 0.0
        %1061 = vmatpush1.msra.mxu0 0.0
        %1062 = vmatprep.mubr.f32.mxu0 0.0
        %1063 = vmatmul.mubr.f32.gmra.mrb[0].mxu0 %v996
        %v1064 = vpop.f32.mrb[0].mxu0
        %v1065 = vadd.f32 0.0, %v1064
        %v1066 = vpop.f32.mrb[0].mxu0
        %1067 = vdwg.mxu0
        %v1068 = vadd.f32 %v541, %v1065
        %v1069 = vxor.u32 %v1068, 2147483648
        %v1070 = vmul.f32 %v1069, 1.442695
        %v1071 = vpow.pop %v1070
        %v1072 = vadd.f32 %v1071, 1.0
        %v1073 = vrcp.pop %v1072
        %v1074 = vmul.f32 1.0, %v1073
        %v1075 = vadd.f32 %v1065, %v651
        %1077 = vrot.lane.b32.xlu0 %v1075, 64
        %v1078 = vpop.permute.xlu0 %1077
        %v1080 = vmul.f32 %v1074, %v1078
        %1082 = vrot.lane.b32.xlu0 %v1080, 64
        %v1083 = vpop.permute.xlu0 %1082
        %v1085 = vadd.f32 %v541, %v1083
        %v1086 = vtanh.pop %v1085
        %v1087 = vsub.f32 1.0, %v1074
        %1089 = vrot.lane.b32.xlu0 %v1086, 96
        %v1090 = vpop.permute.xlu0 %1089
        %v1092 = vmul.f32 %v1087, %v1090
        %v1093 = vmul.f32 %v1074, %v989
        %v1094 = vadd.f32 %v1092, %v1093
        %1096 = vrot.lane.b32.xlu0 %v1094, 96
        %v1097 = vpop.permute.xlu0 %1096
        %1099 = vst.msk [vmem:[#allocation2 + $0x20] sm:$0xff] %vm677, %v1097
        %1100 = vst.msk [vmem:[#allocation2 + $0x18] sm:$0xff] %vm679, %v1097
        %v1101 = vsel %vm564, %v1097, 0
        %1103 = vmatprep.subr.mxu0 0.0
        %1104 = vmatpush1.msra.mxu0 %v559
        %1105 = vmatprep.subr.mxu0 0.0
        %1106 = vmatpush1.msra.mxu0 %v560
        %1107 = vmatprep.subr.mxu0 0.0
        %1108 = vmatpush1.msra.mxu0 %v561
        %1109 = vmatprep.subr.mxu0 0.0
        %1110 = vmatpush1.msra.mxu0 %v562
        %1111 = vmatprep.subr.mxu0 0.0
        %1112 = vmatpush1.msra.mxu0 0.0
        %1113 = vmatprep.subr.mxu0 0.0
        %1114 = vmatpush1.msra.mxu0 0.0
        %1115 = vmatprep.subr.mxu0 0.0
        %1116 = vmatpush1.msra.mxu0 0.0
        %1117 = vmatprep.subr.mxu0 0.0
        %1118 = vmatpush1.msra.mxu0 0.0
        %1119 = vmatprep.subr.mxu0 0.0
        %1120 = vmatpush1.msra.mxu0 0.0
        %1121 = vmatprep.subr.mxu0 0.0
        %1122 = vmatpush1.msra.mxu0 0.0
        %1123 = vmatprep.subr.mxu0 0.0
        %1124 = vmatpush1.msra.mxu0 0.0
        %1125 = vmatprep.subr.mxu0 0.0
        %1126 = vmatpush1.msra.mxu0 0.0
        %1127 = vmatprep.subr.mxu0 0.0
        %1128 = vmatpush1.msra.mxu0 0.0
        %1129 = vmatprep.subr.mxu0 0.0
        %1130 = vmatpush1.msra.mxu0 0.0
        %1131 = vmatprep.subr.mxu0 0.0
        %1132 = vmatpush1.msra.mxu0 0.0
        %1133 = vmatprep.subr.mxu0 0.0
        %1134 = vmatpush1.msra.mxu0 0.0
        %1135 = vmatprep.subr.mxu0 0.0
        %1136 = vmatpush1.msra.mxu0 0.0
        %1137 = vmatprep.subr.mxu0 0.0
        %1138 = vmatpush1.msra.mxu0 0.0
        %1139 = vmatprep.subr.mxu0 0.0
        %1140 = vmatpush1.msra.mxu0 0.0
        %1141 = vmatprep.subr.mxu0 0.0
        %1142 = vmatpush1.msra.mxu0 0.0
        %1143 = vmatprep.subr.mxu0 0.0
        %1144 = vmatpush1.msra.mxu0 0.0
        %1145 = vmatprep.subr.mxu0 0.0
        %1146 = vmatpush1.msra.mxu0 0.0
        %1147 = vmatprep.subr.mxu0 0.0
        %1148 = vmatpush1.msra.mxu0 0.0
        %1149 = vmatprep.subr.mxu0 0.0
        %1150 = vmatpush1.msra.mxu0 0.0
        %1151 = vmatprep.subr.mxu0 0.0
        %1152 = vmatpush1.msra.mxu0 0.0
        %1153 = vmatprep.subr.mxu0 0.0
        %1154 = vmatpush1.msra.mxu0 0.0
        %1155 = vmatprep.subr.mxu0 0.0
        %1156 = vmatpush1.msra.mxu0 0.0
        %1157 = vmatprep.subr.mxu0 0.0
        %1158 = vmatpush1.msra.mxu0 0.0
        %1159 = vmatprep.subr.mxu0 0.0
        %1160 = vmatpush1.msra.mxu0 0.0
        %1161 = vmatprep.subr.mxu0 0.0
        %1162 = vmatpush1.msra.mxu0 0.0
        %1163 = vmatprep.subr.mxu0 0.0
        %1164 = vmatpush1.msra.mxu0 0.0
        %1165 = vmatprep.subr.mxu0 0.0
        %1166 = vmatpush1.msra.mxu0 0.0
        %1167 = vmatprep.mubr.f32.mxu0 0.0
        %1168 = vmatmul.mubr.f32.gmra.mrb[0].mxu0 %v1101
        %v1169 = vpop.f32.mrb[0].mxu0
        %v1170 = vadd.f32 0.0, %v1169
        %v1171 = vpop.f32.mrb[0].mxu0
        %1172 = vdwg.mxu0
        %v1173 = vadd.f32 %v546, %v1170
        %v1174 = vxor.u32 %v1173, 2147483648
        %v1175 = vmul.f32 %v1174, 1.442695
        %v1176 = vpow.pop %v1175
        %v1177 = vadd.f32 %v1176, 1.0
        %v1178 = vrcp.pop %v1177
        %v1179 = vmul.f32 1.0, %v1178
        %v1180 = vadd.f32 %v1170, %v651
        %1182 = vrot.lane.b32.xlu0 %v1180, 64
        %v1183 = vpop.permute.xlu0 %1182
        %v1185 = vmul.f32 %v1179, %v1183
        %1187 = vrot.lane.b32.xlu0 %v1185, 64
        %v1188 = vpop.permute.xlu0 %1187
        %v1190 = vadd.f32 %v546, %v1188
        %v1191 = vtanh.pop %v1190
        %v1192 = vsub.f32 1.0, %v1179
        %1194 = vrot.lane.b32.xlu0 %v1191, 96
        %v1195 = vpop.permute.xlu0 %1194
        %v1197 = vmul.f32 %v1192, %v1195
        %v1198 = vmul.f32 %v1179, %v1094
        %v1199 = vadd.f32 %v1197, %v1198
        %1201 = vrot.lane.b32.xlu0 %v1199, 96
        %v1202 = vpop.permute.xlu0 %1201
        %1204 = vst.msk [vmem:[#allocation2 + $0x28] sm:$0xff] %vm677, %v1202
        %1205 = vst.msk [vmem:[#allocation2 + $0x10] sm:$0xff] %vm679, %v1202
        %v1206 = vsel %vm564, %v1202, 0
        %1208 = vmatprep.subr.mxu0 0.0
        %1209 = vmatpush1.msra.mxu0 %v559
        %1210 = vmatprep.subr.mxu0 0.0
        %1211 = vmatpush1.msra.mxu0 %v560
        %1212 = vmatprep.subr.mxu0 0.0
        %1213 = vmatpush1.msra.mxu0 %v561
        %1214 = vmatprep.subr.mxu0 0.0
        %1215 = vmatpush1.msra.mxu0 %v562
        %1216 = vmatprep.subr.mxu0 0.0
        %1217 = vmatpush1.msra.mxu0 0.0
        %1218 = vmatprep.subr.mxu0 0.0
        %1219 = vmatpush1.msra.mxu0 0.0
        %1220 = vmatprep.subr.mxu0 0.0
        %1221 = vmatpush1.msra.mxu0 0.0
        %1222 = vmatprep.subr.mxu0 0.0
        %1223 = vmatpush1.msra.mxu0 0.0
        %1224 = vmatprep.subr.mxu0 0.0
        %1225 = vmatpush1.msra.mxu0 0.0
        %1226 = vmatprep.subr.mxu0 0.0
        %1227 = vmatpush1.msra.mxu0 0.0
        %1228 = vmatprep.subr.mxu0 0.0
        %1229 = vmatpush1.msra.mxu0 0.0
        %1230 = vmatprep.subr.mxu0 0.0
        %1231 = vmatpush1.msra.mxu0 0.0
        %1232 = vmatprep.subr.mxu0 0.0
        %1233 = vmatpush1.msra.mxu0 0.0
        %1234 = vmatprep.subr.mxu0 0.0
        %1235 = vmatpush1.msra.mxu0 0.0
        %1236 = vmatprep.subr.mxu0 0.0
        %1237 = vmatpush1.msra.mxu0 0.0
        %1238 = vmatprep.subr.mxu0 0.0
        %1239 = vmatpush1.msra.mxu0 0.0
        %1240 = vmatprep.subr.mxu0 0.0
        %1241 = vmatpush1.msra.mxu0 0.0
        %1242 = vmatprep.subr.mxu0 0.0
        %1243 = vmatpush1.msra.mxu0 0.0
        %1244 = vmatprep.subr.mxu0 0.0
        %1245 = vmatpush1.msra.mxu0 0.0
        %1246 = vmatprep.subr.mxu0 0.0
        %1247 = vmatpush1.msra.mxu0 0.0
        %1248 = vmatprep.subr.mxu0 0.0
        %1249 = vmatpush1.msra.mxu0 0.0
        %1250 = vmatprep.subr.mxu0 0.0
        %1251 = vmatpush1.msra.mxu0 0.0
        %1252 = vmatprep.subr.mxu0 0.0
        %1253 = vmatpush1.msra.mxu0 0.0
        %1254 = vmatprep.subr.mxu0 0.0
        %1255 = vmatpush1.msra.mxu0 0.0
        %1256 = vmatprep.subr.mxu0 0.0
        %1257 = vmatpush1.msra.mxu0 0.0
        %1258 = vmatprep.subr.mxu0 0.0
        %1259 = vmatpush1.msra.mxu0 0.0
        %1260 = vmatprep.subr.mxu0 0.0
        %1261 = vmatpush1.msra.mxu0 0.0
        %1262 = vmatprep.subr.mxu0 0.0
        %1263 = vmatpush1.msra.mxu0 0.0
        %1264 = vmatprep.subr.mxu0 0.0
        %1265 = vmatpush1.msra.mxu0 0.0
        %1266 = vmatprep.subr.mxu0 0.0
        %1267 = vmatpush1.msra.mxu0 0.0
        %1268 = vmatprep.subr.mxu0 0.0
        %1269 = vmatpush1.msra.mxu0 0.0
        %1270 = vmatprep.subr.mxu0 0.0
        %1271 = vmatpush1.msra.mxu0 0.0
        %1272 = vmatprep.mubr.f32.mxu0 0.0
        %1273 = vmatmul.mubr.f32.gmra.mrb[0].mxu0 %v1206
        %v1274 = vpop.f32.mrb[0].mxu0
        %v1275 = vadd.f32 0.0, %v1274
        %v1276 = vpop.f32.mrb[0].mxu0
        %1277 = vdwg.mxu0
        %v1278 = vadd.f32 %v551, %v1275
        %v1279 = vxor.u32 %v1278, 2147483648
        %v1280 = vmul.f32 %v1279, 1.442695
        %v1281 = vpow.pop %v1280
        %v1282 = vadd.f32 %v1281, 1.0
        %v1283 = vrcp.pop %v1282
        %v1284 = vmul.f32 1.0, %v1283
        %v1285 = vadd.f32 %v1275, %v651
        %1287 = vrot.lane.b32.xlu0 %v1285, 64
        %v1288 = vpop.permute.xlu0 %1287
        %v1290 = vmul.f32 %v1284, %v1288
        %1292 = vrot.lane.b32.xlu0 %v1290, 64
        %v1293 = vpop.permute.xlu0 %1292
        %v1295 = vadd.f32 %v551, %v1293
        %v1296 = vtanh.pop %v1295
        %v1297 = vsub.f32 1.0, %v1284
        %1299 = vrot.lane.b32.xlu0 %v1296, 96
        %v1300 = vpop.permute.xlu0 %1299
        %v1302 = vmul.f32 %v1297, %v1300
        %v1303 = vmul.f32 %v1284, %v1199
        %v1304 = vadd.f32 %v1302, %v1303
        %1306 = vrot.lane.b32.xlu0 %v1304, 96
        %v1307 = vpop.permute.xlu0 %1306
        %1309 = vst.msk [vmem:[#allocation2 + $0x30] sm:$0xff] %vm677, %v1307
        %1310 = vst.msk [vmem:[#allocation2 + $0x8] sm:$0xff] %vm679, %v1307
        %v1311 = vsel %vm564, %v1307, 0
        %1313 = vmatprep.subr.mxu0 0.0
        %1314 = vmatpush1.msra.mxu0 %v559
        %1315 = vmatprep.subr.mxu0 0.0
        %1316 = vmatpush1.msra.mxu0 %v560
        %1317 = vmatprep.subr.mxu0 0.0
        %1318 = vmatpush1.msra.mxu0 %v561
        %1319 = vmatprep.subr.mxu0 0.0
        %1320 = vmatpush1.msra.mxu0 %v562
        %1321 = vmatprep.subr.mxu0 0.0
        %1322 = vmatpush1.msra.mxu0 0.0
        %1323 = vmatprep.subr.mxu0 0.0
        %1324 = vmatpush1.msra.mxu0 0.0
        %1325 = vmatprep.subr.mxu0 0.0
        %1326 = vmatpush1.msra.mxu0 0.0
        %1327 = vmatprep.subr.mxu0 0.0
        %1328 = vmatpush1.msra.mxu0 0.0
        %1329 = vmatprep.subr.mxu0 0.0
        %1330 = vmatpush1.msra.mxu0 0.0
        %1331 = vmatprep.subr.mxu0 0.0
        %1332 = vmatpush1.msra.mxu0 0.0
        %1333 = vmatprep.subr.mxu0 0.0
        %1334 = vmatpush1.msra.mxu0 0.0
        %1335 = vmatprep.subr.mxu0 0.0
        %1336 = vmatpush1.msra.mxu0 0.0
        %1337 = vmatprep.subr.mxu0 0.0
        %1338 = vmatpush1.msra.mxu0 0.0
        %1339 = vmatprep.subr.mxu0 0.0
        %1340 = vmatpush1.msra.mxu0 0.0
        %1341 = vmatprep.subr.mxu0 0.0
        %1342 = vmatpush1.msra.mxu0 0.0
        %1343 = vmatprep.subr.mxu0 0.0
        %1344 = vmatpush1.msra.mxu0 0.0
        %1345 = vmatprep.subr.mxu0 0.0
        %1346 = vmatpush1.msra.mxu0 0.0
        %1347 = vmatprep.subr.mxu0 0.0
        %1348 = vmatpush1.msra.mxu0 0.0
        %1349 = vmatprep.subr.mxu0 0.0
        %1350 = vmatpush1.msra.mxu0 0.0
        %1351 = vmatprep.subr.mxu0 0.0
        %1352 = vmatpush1.msra.mxu0 0.0
        %1353 = vmatprep.subr.mxu0 0.0
        %1354 = vmatpush1.msra.mxu0 0.0
        %1355 = vmatprep.subr.mxu0 0.0
        %1356 = vmatpush1.msra.mxu0 0.0
        %1357 = vmatprep.subr.mxu0 0.0
        %1358 = vmatpush1.msra.mxu0 0.0
        %1359 = vmatprep.subr.mxu0 0.0
        %1360 = vmatpush1.msra.mxu0 0.0
        %1361 = vmatprep.subr.mxu0 0.0
        %1362 = vmatpush1.msra.mxu0 0.0
        %1363 = vmatprep.subr.mxu0 0.0
        %1364 = vmatpush1.msra.mxu0 0.0
        %1365 = vmatprep.subr.mxu0 0.0
        %1366 = vmatpush1.msra.mxu0 0.0
        %1367 = vmatprep.subr.mxu0 0.0
        %1368 = vmatpush1.msra.mxu0 0.0
        %1369 = vmatprep.subr.mxu0 0.0
        %1370 = vmatpush1.msra.mxu0 0.0
        %1371 = vmatprep.subr.mxu0 0.0
        %1372 = vmatpush1.msra.mxu0 0.0
        %1373 = vmatprep.subr.mxu0 0.0
        %1374 = vmatpush1.msra.mxu0 0.0
        %1375 = vmatprep.subr.mxu0 0.0
        %1376 = vmatpush1.msra.mxu0 0.0
        %1377 = vmatprep.mubr.f32.mxu0 0.0
        %1378 = vmatmul.mubr.f32.gmra.mrb[0].mxu0 %v1311
        %v1379 = vpop.f32.mrb[0].mxu0
        %v1380 = vadd.f32 0.0, %v1379
        %v1381 = vpop.f32.mrb[0].mxu0
        %1382 = vdwg.mxu0
        %v1383 = vadd.f32 %v556, %v1380
        %v1384 = vxor.u32 %v1383, 2147483648
        %v1385 = vmul.f32 %v1384, 1.442695
        %v1386 = vpow.pop %v1385
        %v1387 = vadd.f32 %v1386, 1.0
        %v1388 = vrcp.pop %v1387
        %v1389 = vmul.f32 1.0, %v1388
        %v1390 = vadd.f32 %v1380, %v651
        %1392 = vrot.lane.b32.xlu0 %v1390, 64
        %v1393 = vpop.permute.xlu0 %1392
        %v1395 = vmul.f32 %v1389, %v1393
        %1397 = vrot.lane.b32.xlu0 %v1395, 64
        %v1398 = vpop.permute.xlu0 %1397
        %v1400 = vadd.f32 %v556, %v1398
        %v1401 = vtanh.pop %v1400
        %v1402 = vsub.f32 1.0, %v1389
        %1404 = vrot.lane.b32.xlu0 %v1401, 96
        %v1405 = vpop.permute.xlu0 %1404
        %v1407 = vmul.f32 %v1402, %v1405
        %v1408 = vmul.f32 %v1389, %v1304
        %v1409 = vadd.f32 %v1407, %v1408
        %1411 = vrot.lane.b32.xlu0 %v1409, 96
        %v1412 = vpop.permute.xlu0 %1411
        %1414 = vst.msk [vmem:[#allocation2 + $0x38] sm:$0xff] %vm677, %v1412
        %1415 = vst.msk [vmem:[#allocation2] sm:$0xff] %vm679, %v1412
        %v1416 = vld [vmem:[#allocation2] sm:$0xff]
        %v1417 = vld [vmem:[#allocation2 + $0x8] sm:$0xff]
        %v1418 = vld [vmem:[#allocation2 + $0x10] sm:$0xff]
        %v1419 = vld [vmem:[#allocation2 + $0x18] sm:$0xff]
        %v1420 = vld [vmem:[#allocation2 + $0x20] sm:$0xff]
        %v1421 = vld [vmem:[#allocation2 + $0x28] sm:$0xff]
        %v1422 = vld [vmem:[#allocation2 + $0x30] sm:$0xff]
        %v1423 = vld [vmem:[#allocation2 + $0x38] sm:$0xff]
        %v1424 = vld [vmem:[#allocation7] sm:$0xff]
        %v1425 = vld [vmem:[#allocation7 + $0x8] sm:$0xff]
        %v1426 = vld [vmem:[#allocation7 + $0x10] sm:$0xff]
        %v1427 = vld [vmem:[#allocation7 + $0x18] sm:$0xff]
        %v1428 = vld [vmem:[%s6] sm:$0x1]
        %v1430 = vlaneseq
        %v1431 = vshrl.u32 %v1430, 7
        %v1432 = vsub.s32 0, %v1431
        %v1433 = vrot.slane %v1428, %v1432
        %v1436 = vsel %vm564, %v1416, 0
        %v1439 = vsel %vm564, %v1417, 0
        %v1442 = vsel %vm564, %v1418, 0
        %v1445 = vsel %vm564, %v1419, 0
        %v1448 = vsel %vm564, %v1420, 0
        %v1451 = vsel %vm564, %v1421, 0
        %v1454 = vsel %vm564, %v1422, 0
        %v1457 = vsel %vm564, %v1423, 0
        %1459 = vmatprep.subr.mxu0 0.0
        %1460 = vmatpush1.msra.mxu0 %v1424
        %1461 = vmatprep.subr.mxu0 0.0
        %1462 = vmatpush1.msra.mxu0 %v1425
        %1463 = vmatprep.subr.mxu0 0.0
        %1464 = vmatpush1.msra.mxu0 %v1426
        %1465 = vmatprep.subr.mxu0 0.0
        %1466 = vmatpush1.msra.mxu0 %v1427
        %1467 = vmatprep.subr.mxu0 0.0
        %1468 = vmatpush1.msra.mxu0 0.0
        %1469 = vmatprep.subr.mxu0 0.0
        %1470 = vmatpush1.msra.mxu0 0.0
        %1471 = vmatprep.subr.mxu0 0.0
        %1472 = vmatpush1.msra.mxu0 0.0
        %1473 = vmatprep.subr.mxu0 0.0
        %1474 = vmatpush1.msra.mxu0 0.0
        %1475 = vmatprep.subr.mxu0 0.0
        %1476 = vmatpush1.msra.mxu0 0.0
        %1477 = vmatprep.subr.mxu0 0.0
        %1478 = vmatpush1.msra.mxu0 0.0
        %1479 = vmatprep.subr.mxu0 0.0
        %1480 = vmatpush1.msra.mxu0 0.0
        %1481 = vmatprep.subr.mxu0 0.0
        %1482 = vmatpush1.msra.mxu0 0.0
        %1483 = vmatprep.subr.mxu0 0.0
        %1484 = vmatpush1.msra.mxu0 0.0
        %1485 = vmatprep.subr.mxu0 0.0
        %1486 = vmatpush1.msra.mxu0 0.0
        %1487 = vmatprep.subr.mxu0 0.0
        %1488 = vmatpush1.msra.mxu0 0.0
        %1489 = vmatprep.subr.mxu0 0.0
        %1490 = vmatpush1.msra.mxu0 0.0
        %1491 = vmatprep.subr.mxu0 0.0
        %1492 = vmatpush1.msra.mxu0 0.0
        %1493 = vmatprep.subr.mxu0 0.0
        %1494 = vmatpush1.msra.mxu0 0.0
        %1495 = vmatprep.subr.mxu0 0.0
        %1496 = vmatpush1.msra.mxu0 0.0
        %1497 = vmatprep.subr.mxu0 0.0
        %1498 = vmatpush1.msra.mxu0 0.0
        %1499 = vmatprep.subr.mxu0 0.0
        %1500 = vmatpush1.msra.mxu0 0.0
        %1501 = vmatprep.subr.mxu0 0.0
        %1502 = vmatpush1.msra.mxu0 0.0
        %1503 = vmatprep.subr.mxu0 0.0
        %1504 = vmatpush1.msra.mxu0 0.0
        %1505 = vmatprep.subr.mxu0 0.0
        %1506 = vmatpush1.msra.mxu0 0.0
        %1507 = vmatprep.subr.mxu0 0.0
        %1508 = vmatpush1.msra.mxu0 0.0
        %1509 = vmatprep.subr.mxu0 0.0
        %1510 = vmatpush1.msra.mxu0 0.0
        %1511 = vmatprep.subr.mxu0 0.0
        %1512 = vmatpush1.msra.mxu0 0.0
        %1513 = vmatprep.subr.mxu0 0.0
        %1514 = vmatpush1.msra.mxu0 0.0
        %1515 = vmatprep.subr.mxu0 0.0
        %1516 = vmatpush1.msra.mxu0 0.0
        %1517 = vmatprep.subr.mxu0 0.0
        %1518 = vmatpush1.msra.mxu0 0.0
        %1519 = vmatprep.subr.mxu0 0.0
        %1520 = vmatpush1.msra.mxu0 0.0
        %1521 = vmatprep.subr.mxu0 0.0
        %1522 = vmatpush1.msra.mxu0 0.0
        %1523 = vmatprep.mubr.f32.mxu0 0.0
        %1524 = vmatmul.mubr.f32.gmra.mrb[0].mxu0 %v1436
        %v1525 = vpop.f32.mrb[0].mxu0
        %v1526 = vadd.f32 %v1433, %v1525
        %v1527 = vpop.f32.mrb[0].mxu0
        %1528 = vmatprep.mubr.f32.mxu0 0.0
        %1529 = vmatmul.mubr.f32.gmra.mrb[0].mxu0 %v1439
        %v1530 = vpop.f32.mrb[0].mxu0
        %v1531 = vadd.f32 %v1433, %v1530
        %v1532 = vpop.f32.mrb[0].mxu0
        %1533 = vmatprep.mubr.f32.mxu0 0.0
        %1534 = vmatmul.mubr.f32.gmra.mrb[0].mxu0 %v1442
        %v1535 = vpop.f32.mrb[0].mxu0
        %v1536 = vadd.f32 %v1433, %v1535
        %v1537 = vpop.f32.mrb[0].mxu0
        %1538 = vmatprep.mubr.f32.mxu0 0.0
        %1539 = vmatmul.mubr.f32.gmra.mrb[0].mxu0 %v1445
        %v1540 = vpop.f32.mrb[0].mxu0
        %v1541 = vadd.f32 %v1433, %v1540
        %v1542 = vpop.f32.mrb[0].mxu0
        %1543 = vmatprep.mubr.f32.mxu0 0.0
        %1544 = vmatmul.mubr.f32.gmra.mrb[0].mxu0 %v1448
        %v1545 = vpop.f32.mrb[0].mxu0
        %v1546 = vadd.f32 %v1433, %v1545
        %v1547 = vpop.f32.mrb[0].mxu0
        %1548 = vmatprep.mubr.f32.mxu0 0.0
        %1549 = vmatmul.mubr.f32.gmra.mrb[0].mxu0 %v1451
        %v1550 = vpop.f32.mrb[0].mxu0
        %v1551 = vadd.f32 %v1433, %v1550
        %v1552 = vpop.f32.mrb[0].mxu0
        %1553 = vmatprep.mubr.f32.mxu0 0.0
        %1554 = vmatmul.mubr.f32.gmra.mrb[0].mxu0 %v1454
        %v1555 = vpop.f32.mrb[0].mxu0
        %v1556 = vadd.f32 %v1433, %v1555
        %v1557 = vpop.f32.mrb[0].mxu0
        %1558 = vmatprep.mubr.f32.mxu0 0.0
        %1559 = vmatmul.mubr.f32.gmra.mrb[0].mxu0 %v1457
        %v1560 = vpop.f32.mrb[0].mxu0
        %v1561 = vadd.f32 %v1433, %v1560
        %v1562 = vpop.f32.mrb[0].mxu0
        %1563 = vdwg.mxu0
        %v1564 = vtanh.pop %v1526
        %v1565 = vtanh.pop %v1531
        %v1566 = vtanh.pop %v1536
        %v1567 = vtanh.pop %v1541
        %v1568 = vtanh.pop %v1546
        %v1569 = vtanh.pop %v1551
        %v1570 = vtanh.pop %v1556
        %v1571 = vtanh.pop %v1561
        %v1572 = vld [vmem:[%s7] sm:$0x1]
        %v1574 = vlaneseq
        %v1575 = vshrl.u32 %v1574, 7
        %v1576 = vsub.s32 0, %v1575
        %v1577 = vrot.slane %v1572, %v1576
        %v1579 = vmul.f32 %v1564, %v1577
        %v1580 = vmul.f32 %v1565, %v1577
        %v1581 = vmul.f32 %v1566, %v1577
        %v1582 = vmul.f32 %v1567, %v1577
        %v1583 = vmul.f32 %v1568, %v1577
        %v1584 = vmul.f32 %v1569, %v1577
        %v1585 = vmul.f32 %v1570, %v1577
        %v1586 = vmul.f32 %v1571, %v1577
        %v1587 = vsel %vm564, %v1579, 0.0
        %1588 = vadd.xlane.f32.xlu0 %v1587
        %v1589 = vpop.xlane.xlu0 %1588
        %v1590 = vsel %vm564, %v1580, 0.0
        %1591 = vadd.xlane.f32.xlu0 %v1590
        %v1592 = vpop.xlane.xlu0 %1591
        %v1593 = vsel %vm564, %v1581, 0.0
        %1594 = vadd.xlane.f32.xlu0 %v1593
        %v1595 = vpop.xlane.xlu0 %1594
        %v1596 = vsel %vm564, %v1582, 0.0
        %1597 = vadd.xlane.f32.xlu0 %v1596
        %v1598 = vpop.xlane.xlu0 %1597
        %v1599 = vsel %vm564, %v1583, 0.0
        %1600 = vadd.xlane.f32.xlu0 %v1599
        %v1601 = vpop.xlane.xlu0 %1600
        %v1602 = vsel %vm564, %v1584, 0.0
        %1603 = vadd.xlane.f32.xlu0 %v1602
        %v1604 = vpop.xlane.xlu0 %1603
        %v1605 = vsel %vm564, %v1585, 0.0
        %1606 = vadd.xlane.f32.xlu0 %v1605
        %v1607 = vpop.xlane.xlu0 %1606
        %v1608 = vsel %vm564, %v1586, 0.0
        %1609 = vadd.xlane.f32.xlu0 %v1608
        %v1610 = vpop.xlane.xlu0 %1609
        %v1611 = vmax.f32 %v1589, %v1601
        %v1612 = vmax.f32 %v1592, %v1604
        %v1613 = vmax.f32 %v1595, %v1607
        %v1614 = vmax.f32 %v1598, %v1610
        %v1615 = vmax.f32 %v1611, %v1612
        %v1616 = vmax.f32 %v1613, %v1614
        %v1617 = vmax.f32 %v1615, %v1616
        %v1618 = vsub.f32 %v1589, %v1617
        %v1619 = vsub.f32 %v1592, %v1617
        %v1620 = vsub.f32 %v1595, %v1617
        %v1621 = vsub.f32 %v1598, %v1617
        %v1622 = vsub.f32 %v1601, %v1617
        %v1623 = vsub.f32 %v1604, %v1617
        %v1624 = vsub.f32 %v1607, %v1617
        %v1625 = vsub.f32 %v1610, %v1617
        %v1626 = vmul.f32 %v1618, 1.442695
        %v1627 = vpow.pop %v1626
        %v1628 = vmul.f32 %v1619, 1.442695
        %v1629 = vpow.pop %v1628
        %v1630 = vmul.f32 %v1620, 1.442695
        %v1631 = vpow.pop %v1630
        %v1632 = vmul.f32 %v1621, 1.442695
        %v1633 = vpow.pop %v1632
        %v1634 = vmul.f32 %v1622, 1.442695
        %v1635 = vpow.pop %v1634
        %v1636 = vmul.f32 %v1623, 1.442695
        %v1637 = vpow.pop %v1636
        %v1638 = vmul.f32 %v1624, 1.442695
        %v1639 = vpow.pop %v1638
        %v1640 = vmul.f32 %v1625, 1.442695
        %v1641 = vpow.pop %v1640
        %v1642 = vadd.f32 %v1627, %v1629
        %v1643 = vadd.f32 %v1642, %v1631
        %v1644 = vadd.f32 %v1643, %v1633
        %v1645 = vadd.f32 %v1644, %v1635
        %v1646 = vadd.f32 %v1645, %v1637
        %v1647 = vadd.f32 %v1646, %v1639
        %v1648 = vadd.f32 %v1647, %v1641
        %v1649 = vrcp.pop %v1648
        %v1650 = vmul.f32 %v1627, %v1649
        %v1651 = vmul.f32 %v1629, %v1649
        %v1652 = vmul.f32 %v1631, %v1649
        %v1653 = vmul.f32 %v1633, %v1649
        %v1654 = vmul.f32 %v1635, %v1649
        %v1655 = vmul.f32 %v1637, %v1649
        %v1656 = vmul.f32 %v1639, %v1649
        %v1657 = vmul.f32 %v1641, %v1649
        %v1658 = vmul.f32 %v1416, %v1650
        %v1659 = vmul.f32 %v1417, %v1651
        %v1660 = vmul.f32 %v1418, %v1652
        %v1661 = vmul.f32 %v1419, %v1653
        %v1662 = vmul.f32 %v1420, %v1654
        %v1663 = vmul.f32 %v1421, %v1655
        %v1664 = vmul.f32 %v1422, %v1656
        %v1665 = vmul.f32 %v1423, %v1657
        %v1666 = vsel %vm564, %v1658, 0.0
        %v1667 = vsel %vm564, %v1659, 0.0
        %v1668 = vadd.f32 %v1666, %v1667
        %v1669 = vsel %vm564, %v1660, 0.0
        %v1670 = vadd.f32 %v1668, %v1669
        %v1671 = vsel %vm564, %v1661, 0.0
        %v1672 = vadd.f32 %v1670, %v1671
        %v1673 = vsel %vm564, %v1662, 0.0
        %v1674 = vadd.f32 %v1672, %v1673
        %v1675 = vsel %vm564, %v1663, 0.0
        %v1676 = vadd.f32 %v1674, %v1675
        %v1677 = vsel %vm564, %v1664, 0.0
        %v1678 = vadd.f32 %v1676, %v1677
        %v1679 = vsel %vm564, %v1665, 0.0
        %v1680 = vadd.f32 %v1678, %v1679
        %v1681 = vld [vmem:[%s8] sm:$0xff]
        %v1682 = vld [vmem:[%s8 + $0x8] sm:$0xff]
        %v1683 = vld [vmem:[%s8 + $0x10] sm:$0xff]
        %v1684 = vld [vmem:[%s8 + $0x18] sm:$0xff]
        %v1685 = vld [vmem:[%s9] sm:$0x1]
        %v1687 = vlaneseq
        %v1688 = vshrl.u32 %v1687, 7
        %v1689 = vsub.s32 0, %v1688
        %v1690 = vrot.slane %v1685, %v1689
        %v1693 = vsel %vm564, %v1680, 0
        %1695 = vmatprep.subr.mxu0 0.0
        %1696 = vmatpush1.msra.mxu0 %v1681
        %1697 = vmatprep.subr.mxu0 0.0
        %1698 = vmatpush1.msra.mxu0 %v1682
        %1699 = vmatprep.subr.mxu0 0.0
        %1700 = vmatpush1.msra.mxu0 %v1683
        %1701 = vmatprep.subr.mxu0 0.0
        %1702 = vmatpush1.msra.mxu0 %v1684
        %1703 = vmatprep.subr.mxu0 0.0
        %1704 = vmatpush1.msra.mxu0 0.0
        %1705 = vmatprep.subr.mxu0 0.0
        %1706 = vmatpush1.msra.mxu0 0.0
        %1707 = vmatprep.subr.mxu0 0.0
        %1708 = vmatpush1.msra.mxu0 0.0
        %1709 = vmatprep.subr.mxu0 0.0
        %1710 = vmatpush1.msra.mxu0 0.0
        %1711 = vmatprep.subr.mxu0 0.0
        %1712 = vmatpush1.msra.mxu0 0.0
        %1713 = vmatprep.subr.mxu0 0.0
        %1714 = vmatpush1.msra.mxu0 0.0
        %1715 = vmatprep.subr.mxu0 0.0
        %1716 = vmatpush1.msra.mxu0 0.0
        %1717 = vmatprep.subr.mxu0 0.0
        %1718 = vmatpush1.msra.mxu0 0.0
        %1719 = vmatprep.subr.mxu0 0.0
        %1720 = vmatpush1.msra.mxu0 0.0
        %1721 = vmatprep.subr.mxu0 0.0
        %1722 = vmatpush1.msra.mxu0 0.0
        %1723 = vmatprep.subr.mxu0 0.0
        %1724 = vmatpush1.msra.mxu0 0.0
        %1725 = vmatprep.subr.mxu0 0.0
        %1726 = vmatpush1.msra.mxu0 0.0
        %1727 = vmatprep.subr.mxu0 0.0
        %1728 = vmatpush1.msra.mxu0 0.0
        %1729 = vmatprep.subr.mxu0 0.0
        %1730 = vmatpush1.msra.mxu0 0.0
        %1731 = vmatprep.subr.mxu0 0.0
        %1732 = vmatpush1.msra.mxu0 0.0
        %1733 = vmatprep.subr.mxu0 0.0
        %1734 = vmatpush1.msra.mxu0 0.0
        %1735 = vmatprep.subr.mxu0 0.0
        %1736 = vmatpush1.msra.mxu0 0.0
        %1737 = vmatprep.subr.mxu0 0.0
        %1738 = vmatpush1.msra.mxu0 0.0
        %1739 = vmatprep.subr.mxu0 0.0
        %1740 = vmatpush1.msra.mxu0 0.0
        %1741 = vmatprep.subr.mxu0 0.0
        %1742 = vmatpush1.msra.mxu0 0.0
        %1743 = vmatprep.subr.mxu0 0.0
        %1744 = vmatpush1.msra.mxu0 0.0
        %1745 = vmatprep.subr.mxu0 0.0
        %1746 = vmatpush1.msra.mxu0 0.0
        %1747 = vmatprep.subr.mxu0 0.0
        %1748 = vmatpush1.msra.mxu0 0.0
        %1749 = vmatprep.subr.mxu0 0.0
        %1750 = vmatpush1.msra.mxu0 0.0
        %1751 = vmatprep.subr.mxu0 0.0
        %1752 = vmatpush1.msra.mxu0 0.0
        %1753 = vmatprep.subr.mxu0 0.0
        %1754 = vmatpush1.msra.mxu0 0.0
        %1755 = vmatprep.subr.mxu0 0.0
        %1756 = vmatpush1.msra.mxu0 0.0
        %1757 = vmatprep.subr.mxu0 0.0
        %1758 = vmatpush1.msra.mxu0 0.0
        %1759 = vmatprep.mubr.f32.mxu0 0.0
        %1760 = vmatmul.mubr.f32.gmra.mrb[0].mxu0 %v1693
        %v1761 = vpop.f32.mrb[0].mxu0
        %v1762 = vadd.f32 %v1690, %v1761
        %v1763 = vpop.f32.mrb[0].mxu0
        %1764 = vdwg.mxu0
        %vm1765 = vcmask 39936
        %1766 = vst.msk [vmem:[%s405] sm:$0xff] %vm1765, %v1762
        %p1767 = scmp.lt.s32.totalorder %s25, 1
        %s1768 = scalar_select %p1767, %s25, 1
        %s1769 = smul.addr %s1768, 8
        %s1770 = scalar_lea.vmem %s10, %s1769
        // Predicated region
        $region73: #{tpu_custom_call.1} parent=59 // pred_check
          %p1771 = pneg %p258
        $region74: #{tpu_custom_call.1} parent=59 // pred_check_branch
          %1773 = sbr.rel (%p1771) target = $region76
        $region75: #{tpu_custom_call.1} parent=59 // pred_region
          _
        $region76: #{tpu_custom_call.1} parent=59 // pred_fallthru
          _
      $region60: #{tpu_custom_call.1} parent=5 // pred_fallthru
        _
      %p1774 = scmp.le.s32.totalorder 2, %s20
      // Predicated region
      $region77: #{tpu_custom_call.1} parent=5 // pred_check
        %p1775 = pneg %p1774
      $region78: #{tpu_custom_call.1} parent=5 // pred_check_branch
        %1777 = sbr.rel (%p1775) target = $region80
      $region79: #{tpu_custom_call.1} parent=5 // pred_region
        %s1778 = ssub.s32 %s20, 2
        // Predicated region
        $region81: #{tpu_custom_call.1} parent=79 // pred_check
          %p1779 = pneg %p264
        $region82: #{tpu_custom_call.1} parent=79 // pred_check_branch
          %1781 = sbr.rel (%p1779) target = $region84
        $region83: #{tpu_custom_call.1} parent=79 // pred_region
          %p1782 = scmp.lt.s32.totalorder %s26, 1
          %s1783 = scalar_select %p1782, %s26, 1
          %s1784 = smul.addr %s1783, 8
          %s1785 = scalar_lea.vmem %s10, %s1784
        $region84: #{tpu_custom_call.1} parent=79 // pred_fallthru
          _
      $region80: #{tpu_custom_call.1} parent=5 // pred_fallthru
        _
    $region6: #{tpu_custom_call.1} parent=1 // loop_footer
      %s24 = sadd.s32 1, %s20
    $region7: #{tpu_custom_call.1} parent=1 // loop_footer_branch
      %19 = sbr.rel target = $region3
    $region8: #{tpu_custom_call.1} parent=1 // loop_exit
      _
    %1786 = vsyncpa [#allocation4], 1
    %s1787 = scalar_lea.sflag [#allocation4], 1
    %1788 = vsyncpa %s1787, 1
    %1789 = vsyncpa [#allocation6], 1

</llo_original>
